<compile_context>
chip_gen: v7x
topology: tpu7x:2x2x1
jax: 0.10.0
libtpu: 0.0.40
codegen_flags: <defaults>
</compile_context>

<pallas_src>
import math
import functools

import jax
import jax.numpy as jnp
from jax import lax
from jax.experimental import pallas as pl
from jax.experimental.pallas import tpu as pltpu


def masked_mab_kernel(q_ref, k_ref, mq_ref, mcol_ref,
                      wq_ref, bq_ref, wk_ref, bk_ref,
                      wv_ref, bv_ref, wo_ref, bo_ref,
                      o_ref, k_cache, v_cache, *, num_heads, dim_V):
    f32 = jnp.float32
    bf16 = jnp.bfloat16

    # ---- Prologue: (re)compute K / V projections once per batch element. ----
    # Runs only on the first query tile of each batch (qi axis is "arbitrary",
    # so within a core the qi loop completes before b advances).  Only the bf16
    # copies persist in scratch; the f32 temporaries die inside this block.
    @pl.when(pl.program_id(1) == 0)
    def _():
        Kx = k_ref[0]                                   # (N, dim_K) bf16
        # NOTE: wk/bk already carry the 1/sqrt(dim_V) score scale (wrapper).
        # NOTE: key-row mask intentionally dropped (redundant with the column
        # mask inside the masked softmax).
        k_cache[...] = (jnp.dot(Kx, wk_ref[...], preferred_element_type=f32)
                        + bk_ref[...]).astype(bf16)
        v_cache[...] = (jnp.dot(Kx, wv_ref[...], preferred_element_type=f32)
                        + bv_ref[...]).astype(bf16)

    # ---- Per-tile work. ----
    mrow_q = mq_ref[0]                                  # (TQ, 1) query-row mask
    mcol = mcol_ref[0]                                  # (1, N)  key-column mask
    m2d = mrow_q * mcol                                 # (TQ, N) shared by all heads

    Qx = q_ref[0]                                       # (TQ, dim_Q) bf16
    q = (jnp.dot(Qx, wq_ref[...], preferred_element_type=f32)
         + bq_ref[...]) * mrow_q                        # (TQ, dim_V) f32 (residual)
    q_bf = q.astype(bf16)

    k_bf = k_cache[...]                                 # (N, dim_V) bf16
    v_bf = v_cache[...]                                 # (N, dim_V) bf16

    ds = dim_V // num_heads
    dn_nt = (((1,), (1,)), ((), ()))                    # A @ B^T, no B^T materialized

    head_outs = []
    for h in range(num_heads):                          # num_heads is small & static
        sl = slice(h * ds, (h + 1) * ds)
        # (TQ, N) scores for this head (scale already folded into k).
        s = lax.dot_general(q_bf[:, sl], k_bf[:, sl], dn_nt,
                            preferred_element_type=f32)
        # masked_softmax semantics from the reference module:
        #   max over all keys, then (x - max) * m1 * m2, exp, re-mask, normalize.
        mx = jnp.max(s, axis=1, keepdims=True)
        num = jnp.exp((s - mx) * m2d) * m2d
        dem = jnp.sum(num, axis=1, keepdims=True)
        a = num * pl.reciprocal(dem + 1e-16, approx=True)
        head_outs.append(jnp.dot(a.astype(bf16), v_bf[:, sl],
                                 preferred_element_type=f32))   # (TQ, ds)

    # Assemble all heads once (no per-head narrow VMEM stores).
    O = q + jnp.concatenate(head_outs, axis=1)          # (TQ, dim_V)

    # Output projection + masked ReLU residual; single full-slab store.
    fo = (jnp.dot(O.astype(bf16), wo_ref[...], preferred_element_type=f32)
          + bo_ref[...]) * mrow_q
    o_ref[0] = O + jnp.maximum(fo, 0.0)


def _round_up(x, m):
    return ((x + m - 1) // m) * m


def _choose_tiling(N, max_tq=None):
    """Pick (TQ, n_qt, N_pad, vmem_limit) -- generation aware, TQ multiple of 16."""
    try:
        vmem_cap = pltpu.get_tpu_info().vmem_capacity_bytes
    except Exception:
        vmem_cap = 64 * 1024 * 1024                      # conservative fallback
    if vmem_cap <= 64 * 1024 * 1024:                     # v7x-class part
        target, vmem_limit = 128, 40 * 1024 * 1024
    else:                                                # v5e / v6e (128 MiB VMEM)
        target, vmem_limit = 512, 64 * 1024 * 1024
    if max_tq is not None:
        target = _round_up(max_tq, 16)

    if N <= target:
        tq = _round_up(max(N, 16), 16)
        n_qt = 1
    else:
        n_qt = pl.cdiv(N, target)
        tq = _round_up(pl.cdiv(N, n_qt), 16)
    n_pad = tq * n_qt
    return tq, n_qt, n_pad, vmem_limit


def masked_mab(Q, K, mask, params, num_heads, *, max_tq=None):
    B, N, dim_Q = Q.shape
    dim_K = K.shape[-1]
    dim_V = params["wq"].shape[1]
    scale = 1.0 / math.sqrt(dim_V)

    TQ, n_qt, N_pad, vmem_limit = _choose_tiling(N, max_tq)

    pad = N_pad - N
    if pad:
        # Padded rows are fully masked -> contribute nothing, sliced off below.
        Q = jnp.pad(Q, ((0, 0), (0, pad), (0, 0)))
        K = jnp.pad(K, ((0, 0), (0, pad), (0, 0)))
        mask = jnp.pad(mask, ((0, 0), (0, pad)))

    # Masks: (B, N_pad, 1) query-row view (tiled over queries) and
    # (B, 1, N_pad) lane-dense key-column view (full over keys).
    mrow = mask.reshape(B, N_pad, 1).astype(jnp.float32)
    mcol = mask.reshape(B, 1, N_pad).astype(jnp.float32)

    # bf16 activations / weights for the MXU; f32 biases.  Score scale folded into fc_k.
    Qb = Q.astype(jnp.bfloat16)
    Kb = K.astype(jnp.bfloat16)
    wq = params["wq"].astype(jnp.bfloat16)
    wk = (params["wk"] * scale).astype(jnp.bfloat16)
    wv = params["wv"].astype(jnp.bfloat16)
    wo = params["wo"].astype(jnp.bfloat16)
    bq = params["bq"].astype(jnp.float32)
    bk = (params["bk"] * scale).astype(jnp.float32)
    bv = params["bv"].astype(jnp.float32)
    bo = params["bo"].astype(jnp.float32)

    kernel = functools.partial(masked_mab_kernel,
                               num_heads=num_heads, dim_V=dim_V)

    def w2d(shape):
        return pl.BlockSpec(shape, lambda b, qi: (0, 0))

    grid_spec = pltpu.PrefetchScalarGridSpec(
        num_scalar_prefetch=0,
        grid=(B, n_qt),
        in_specs=[
            pl.BlockSpec((1, TQ, dim_Q),   lambda b, qi: (b, qi, 0)),  # Q (query tile)
            pl.BlockSpec((1, N_pad, dim_K), lambda b, qi: (b, 0, 0)),  # K (all keys)
            pl.BlockSpec((1, TQ, 1),       lambda b, qi: (b, qi, 0)),  # mask: query rows
            pl.BlockSpec((1, 1, N_pad),    lambda b, qi: (b, 0, 0)),   # mask: key cols
            w2d((dim_Q, dim_V)), w2d((1, dim_V)),                      # fc_q
            w2d((dim_K, dim_V)), w2d((1, dim_V)),                      # fc_k (pre-scaled)
            w2d((dim_K, dim_V)), w2d((1, dim_V)),                      # fc_v
            w2d((dim_V, dim_V)), w2d((1, dim_V)),                      # fc_o
        ],
        out_specs=pl.BlockSpec((1, TQ, dim_V), lambda b, qi: (b, qi, 0)),
        scratch_shapes=[pltpu.VMEM((N_pad, dim_V), jnp.bfloat16),      # cached K proj
                        pltpu.VMEM((N_pad, dim_V), jnp.bfloat16)],     # cached V proj
    )

    out = pl.pallas_call(
        kernel,
        out_shape=jax.ShapeDtypeStruct((B, N_pad, dim_V), jnp.float32),
        grid_spec=grid_spec,
        compiler_params=pltpu.CompilerParams(
            # batch parallel (megacore sharding on v7x), query-tile arbitrary so the
            # per-batch K/V cache computed at qi == 0 stays coherent within a core.
            dimension_semantics=("parallel", "arbitrary"),
            vmem_limit_bytes=vmem_limit),
    )(Qb, Kb, mrow, mcol, wq, bq, wk, bk, wv, bv, wo, bo)

    return out[:, :N, :] if pad else out


def ref_masked_mab(Q, K, mask, params, num_heads):
    """Pure-JAX f32 reference mirroring the PyTorch forward exactly."""
    dim_V = params["wq"].shape[1]
    B, N, _ = Q.shape
    m = mask.astype(jnp.float32)
    Qp = (Q @ params["wq"] + params["bq"]) * m[..., None]
    Kp = (K @ params["wk"] + params["bk"]) * m[..., None]
    Vp = (K @ params["wv"] + params["bv"]) * m[..., None]
    Q_ = jnp.concatenate(jnp.split(Qp, num_heads, axis=2), axis=0)
    K_ = jnp.concatenate(jnp.split(Kp, num_heads, axis=2), axis=0)
    V_ = jnp.concatenate(jnp.split(Vp, num_heads, axis=2), axis=0)
    X = Q_ @ jnp.swapaxes(K_, 1, 2) / math.sqrt(dim_V)
    Xr = X.reshape(num_heads, B, N, N)
    mx = jnp.max(Xr, axis=3, keepdims=True)
    m1 = m.reshape(1, B, N, 1)
    m2 = m.reshape(1, B, 1, N)
    num = jnp.exp((Xr - mx) * m1 * m2) * m1 * m2
    dem = jnp.sum(num, axis=3, keepdims=True)
    A = (num / (dem + 1e-16)).reshape(num_heads * B, N, N)
    O = jnp.concatenate(jnp.split(Q_ + A @ V_, num_heads, axis=0), axis=2)
    O = O + jax.nn.relu((O @ params["wo"] + params["bo"]) * m[..., None])
    return O


def init_params(key, dim_Q, dim_K, dim_V):
    ks = jax.random.split(key, 8)

    def lin(kw, kb, din, dout):
        w = jax.random.normal(kw, (din, dout), jnp.float32) / math.sqrt(din)
        b = jax.random.normal(kb, (1, dout), jnp.float32) * 0.01
        return w, b

    wq, bq = lin(ks[0], ks[1], dim_Q, dim_V)
    wk, bk = lin(ks[2], ks[3], dim_K, dim_V)
    wv, bv = lin(ks[4], ks[5], dim_K, dim_V)
    wo, bo = lin(ks[6], ks[7], dim_V, dim_V)
    return dict(wq=wq, bq=bq, wk=wk, bk=bk, wv=wv, bv=bv, wo=wo, bo=bo)


if __name__ == "__main__":
    dim_Q, dim_K, dim_V, num_heads = 16, 16, 32, 4

    key = jax.random.PRNGKey(0)
    kq, kk, km, kp, kq2, kk2, km2 = jax.random.split(key, 7)
    params = init_params(kp, dim_Q, dim_K, dim_V)

    # --- config 1: small, single query tile ---
    B, N = 2, 8
    Q = jax.random.normal(kq, (B, N, dim_Q), jnp.float32)
    K = jax.random.normal(kk, (B, N, dim_K), jnp.float32)
    mask = (jax.random.uniform(km, (B, N)) > 0.3).astype(jnp.float32)

    out = jax.block_until_ready(masked_mab(Q, K, mask, params, num_heads))
    ref = ref_masked_mab(Q, K, mask, params, num_heads)
    assert out.shape == (B, N, dim_V)
    diff = float(jnp.max(jnp.abs(out - ref)))
    # bf16 MXU matmuls + approx reciprocal + dropped (redundant) key-row mask
    # => numerically equivalent but not bit-exact vs the f32 reference.
    assert jnp.allclose(out, ref, atol=1e-1, rtol=1e-1), \
        f"mismatch vs JAX reference (max abs diff {diff})"

    # --- config 2: multi query-tile grid (exercises K/V caching + seq padding) ---
    B2, N2 = 2, 40
    Q2 = jax.random.normal(kq2, (B2, N2, dim_Q), jnp.float32)
    K2 = jax.random.normal(kk2, (B2, N2, dim_K), jnp.float32)
    mask2 = (jax.random.uniform(km2, (B2, N2)) > 0.3).astype(jnp.float32)

    out2 = jax.block_until_ready(
        masked_mab(Q2, K2, mask2, params, num_heads, max_tq=16))
    ref2 = ref_masked_mab(Q2, K2, mask2, params, num_heads)
    assert out2.shape == (B2, N2, dim_V)
    diff2 = float(jnp.max(jnp.abs(out2 - ref2)))
    assert jnp.allclose(out2, ref2, atol=1e-1, rtol=1e-1), \
        f"tiled-grid mismatch vs JAX reference (max abs diff {diff2})"

    print("KERNEL_OK")
</pallas_src>

<mosaic_0001>
module attributes {stable_mosaic.version = 11 : i64} {
  func.func @masked_mab_kernel(%arg0: i32, %arg1: i32, %arg2: memref<1x16x16xbf16, #tpu.memory_space<vmem>>, %arg3: memref<1x16x16xbf16, #tpu.memory_space<vmem>>, %arg4: memref<1x16x1xf32, #tpu.memory_space<vmem>>, %arg5: memref<1x1x16xf32, #tpu.memory_space<vmem>>, %arg6: memref<16x32xbf16, #tpu.memory_space<vmem>>, %arg7: memref<1x32xf32, #tpu.memory_space<vmem>>, %arg8: memref<16x32xbf16, #tpu.memory_space<vmem>>, %arg9: memref<1x32xf32, #tpu.memory_space<vmem>>, %arg10: memref<16x32xbf16, #tpu.memory_space<vmem>>, %arg11: memref<1x32xf32, #tpu.memory_space<vmem>>, %arg12: memref<32x32xbf16, #tpu.memory_space<vmem>>, %arg13: memref<1x32xf32, #tpu.memory_space<vmem>>, %arg14: memref<1x16x32xf32, #tpu.memory_space<vmem>>, %arg15: memref<16x32xbf16, #tpu.memory_space<vmem>>, %arg16: memref<16x32xbf16, #tpu.memory_space<vmem>>) attributes {dimension_semantics = [#tpu.dimension_semantics<parallel>, #tpu.dimension_semantics<arbitrary>], iteration_bounds = array<i64: 2, 1>, scalar_prefetch = 0 : i64, scratch_operands = 2 : i64, tpu.core_type = #tpu.core_type<tc>, window_params = [{transform_indices = @transform_0, window_bounds = array<i64: 1, 16, 16>}, {transform_indices = @transform_1, window_bounds = array<i64: 1, 16, 16>}, {transform_indices = @transform_2, window_bounds = array<i64: 1, 16, 1>}, {transform_indices = @transform_3, window_bounds = array<i64: 1, 1, 16>}, {pipeline_mode = #tpu.pipeline_mode<synchronous>, transform_indices = @transform_4, window_bounds = array<i64: 16, 32>}, {pipeline_mode = #tpu.pipeline_mode<synchronous>, transform_indices = @transform_5, window_bounds = array<i64: 1, 32>}, {pipeline_mode = #tpu.pipeline_mode<synchronous>, transform_indices = @transform_6, window_bounds = array<i64: 16, 32>}, {pipeline_mode = #tpu.pipeline_mode<synchronous>, transform_indices = @transform_7, window_bounds = array<i64: 1, 32>}, {pipeline_mode = #tpu.pipeline_mode<synchronous>, transform_indices = @transform_8, window_bounds = array<i64: 16, 32>}, {pipeline_mode = #tpu.pipeline_mode<synchronous>, transform_indices = @transform_9, window_bounds = array<i64: 1, 32>}, {pipeline_mode = #tpu.pipeline_mode<synchronous>, transform_indices = @transform_10, window_bounds = array<i64: 32, 32>}, {pipeline_mode = #tpu.pipeline_mode<synchronous>, transform_indices = @transform_11, window_bounds = array<i64: 1, 32>}, {transform_indices = @transform_12, window_bounds = array<i64: 1, 16, 32>}]} {
    %c0_i32 = arith.constant 0 : i32
    %0 = arith.cmpi eq, %arg1, %c0_i32 : i32
    %1 = arith.extui %0 : i1 to i32
    %c0_i32_0 = arith.constant 0 : i32
    %2 = arith.cmpi ne, %1, %c0_i32_0 : i32
    scf.if %2 {
      %c0_46 = arith.constant 0 : index
      %c0_47 = arith.constant 0 : index
      %c0_48 = arith.constant 0 : index
      %118 = vector.load %arg3[%c0_46, %c0_47, %c0_48] : memref<1x16x16xbf16, #tpu.memory_space<vmem>>, vector<1x16x16xbf16>
      %119 = vector.shape_cast %118 : vector<1x16x16xbf16> to vector<16x16xbf16>
      %c0_49 = arith.constant 0 : index
      %c0_50 = arith.constant 0 : index
      %120 = vector.load %arg8[%c0_49, %c0_50] : memref<16x32xbf16, #tpu.memory_space<vmem>>, vector<16x32xbf16>
      %cst_51 = arith.constant dense<0.000000e+00> : vector<16x32xf32>
      %121 = tpu.matmul %119, %120, %cst_51 {dimension_numbers = #tpu.dot_dimension_numbers<[1], [0], [0], [1], [0, 0, 1, 1], [], []>} : vector<16x16xbf16>, vector<16x32xbf16>, vector<16x32xf32> -> vector<16x32xf32>
      %c0_52 = arith.constant 0 : index
      %c0_53 = arith.constant 0 : index
      %122 = vector.load %arg9[%c0_52, %c0_53] : memref<1x32xf32, #tpu.memory_space<vmem>>, vector<1x32xf32>
      %123 = vector.broadcast %122 : vector<1x32xf32> to vector<16x32xf32>
      %124 = arith.addf %121, %123 : vector<16x32xf32>
      %125 = arith.truncf %124 : vector<16x32xf32> to vector<16x32xbf16>
      %c0_54 = arith.constant 0 : index
      %c0_55 = arith.constant 0 : index
      %126 = vector.load %arg15[%c0_54, %c0_55] : memref<16x32xbf16, #tpu.memory_space<vmem>>, vector<16x32xbf16>
      tpu.vector_store %arg15[%c0_54, %c0_55], %125 {strides = array<i32>} : memref<16x32xbf16, #tpu.memory_space<vmem>>, vector<16x32xbf16>,
      %c0_56 = arith.constant 0 : index
      %c0_57 = arith.constant 0 : index
      %127 = vector.load %arg10[%c0_56, %c0_57] : memref<16x32xbf16, #tpu.memory_space<vmem>>, vector<16x32xbf16>
      %cst_58 = arith.constant dense<0.000000e+00> : vector<16x32xf32>
      %128 = tpu.matmul %119, %127, %cst_58 {dimension_numbers = #tpu.dot_dimension_numbers<[1], [0], [0], [1], [0, 0, 1, 1], [], []>} : vector<16x16xbf16>, vector<16x32xbf16>, vector<16x32xf32> -> vector<16x32xf32>
      %c0_59 = arith.constant 0 : index
      %c0_60 = arith.constant 0 : index
      %129 = vector.load %arg11[%c0_59, %c0_60] : memref<1x32xf32, #tpu.memory_space<vmem>>, vector<1x32xf32>
      %130 = vector.broadcast %129 : vector<1x32xf32> to vector<16x32xf32>
      %131 = arith.addf %128, %130 : vector<16x32xf32>
      %132 = arith.truncf %131 : vector<16x32xf32> to vector<16x32xbf16>
      %c0_61 = arith.constant 0 : index
      %c0_62 = arith.constant 0 : index
      %133 = vector.load %arg16[%c0_61, %c0_62] : memref<16x32xbf16, #tpu.memory_space<vmem>>, vector<16x32xbf16>
      tpu.vector_store %arg16[%c0_61, %c0_62], %132 {strides = array<i32>} : memref<16x32xbf16, #tpu.memory_space<vmem>>, vector<16x32xbf16>,
    } else {
    }
    %c0 = arith.constant 0 : index
    %c0_1 = arith.constant 0 : index
    %c0_2 = arith.constant 0 : index
    %3 = vector.load %arg4[%c0, %c0_1, %c0_2] : memref<1x16x1xf32, #tpu.memory_space<vmem>>, vector<1x16x1xf32>
    %4 = vector.shape_cast %3 : vector<1x16x1xf32> to vector<16x1xf32>
    %c0_3 = arith.constant 0 : index
    %c0_4 = arith.constant 0 : index
    %c0_5 = arith.constant 0 : index
    %5 = vector.load %arg5[%c0_3, %c0_4, %c0_5] : memref<1x1x16xf32, #tpu.memory_space<vmem>>, vector<1x1x16xf32>
    %6 = vector.shape_cast %5 : vector<1x1x16xf32> to vector<1x16xf32>
    %7 = vector.broadcast %4 : vector<16x1xf32> to vector<16x16xf32>
    %8 = vector.broadcast %6 : vector<1x16xf32> to vector<16x16xf32>
    %9 = arith.mulf %7, %8 : vector<16x16xf32>
    %c0_6 = arith.constant 0 : index
    %c0_7 = arith.constant 0 : index
    %c0_8 = arith.constant 0 : index
    %10 = vector.load %arg2[%c0_6, %c0_7, %c0_8] : memref<1x16x16xbf16, #tpu.memory_space<vmem>>, vector<1x16x16xbf16>
    %11 = vector.shape_cast %10 : vector<1x16x16xbf16> to vector<16x16xbf16>
    %c0_9 = arith.constant 0 : index
    %c0_10 = arith.constant 0 : index
    %12 = vector.load %arg6[%c0_9, %c0_10] : memref<16x32xbf16, #tpu.memory_space<vmem>>, vector<16x32xbf16>
    %cst = arith.constant dense<0.000000e+00> : vector<16x32xf32>
    %13 = tpu.matmul %11, %12, %cst {dimension_numbers = #tpu.dot_dimension_numbers<[1], [0], [0], [1], [0, 0, 1, 1], [], []>} : vector<16x16xbf16>, vector<16x32xbf16>, vector<16x32xf32> -> vector<16x32xf32>
    %c0_11 = arith.constant 0 : index
    %c0_12 = arith.constant 0 : index
    %14 = vector.load %arg7[%c0_11, %c0_12] : memref<1x32xf32, #tpu.memory_space<vmem>>, vector<1x32xf32>
    %15 = vector.broadcast %14 : vector<1x32xf32> to vector<16x32xf32>
    %16 = arith.addf %13, %15 : vector<16x32xf32>
    %17 = vector.broadcast %4 : vector<16x1xf32> to vector<16x32xf32>
    %18 = arith.mulf %16, %17 : vector<16x32xf32>
    %19 = arith.truncf %18 : vector<16x32xf32> to vector<16x32xbf16>
    %c0_13 = arith.constant 0 : index
    %c0_14 = arith.constant 0 : index
    %20 = vector.load %arg15[%c0_13, %c0_14] : memref<16x32xbf16, #tpu.memory_space<vmem>>, vector<16x32xbf16>
    %c0_15 = arith.constant 0 : index
    %c0_16 = arith.constant 0 : index
    %21 = vector.load %arg16[%c0_15, %c0_16] : memref<16x32xbf16, #tpu.memory_space<vmem>>, vector<16x32xbf16>
    %22 = vector.extract_strided_slice %19 {offsets = [0, 0], sizes = [16, 8], strides = [1, 1]} : vector<16x32xbf16> to vector<16x8xbf16>
    %23 = vector.extract_strided_slice %20 {offsets = [0, 0], sizes = [16, 8], strides = [1, 1]} : vector<16x32xbf16> to vector<16x8xbf16>
    %cst_17 = arith.constant dense<0.000000e+00> : vector<16x16xf32>
    %24 = tpu.matmul %22, %23, %cst_17 {dimension_numbers = #tpu.dot_dimension_numbers<[1], [1], [0], [0], [0, 0, 1, 0], [], []>} : vector<16x8xbf16>, vector<16x8xbf16>, vector<16x16xf32> -> vector<16x16xf32>
    %cst_18 = arith.constant dense<0xFF800000> : vector<16xf32>
    %25 = vector.multi_reduction <maximumf>, %24, %cst_18 [1] : vector<16x16xf32> to vector<16xf32>
    %26 = vector.shape_cast %25 : vector<16xf32> to vector<16x1xf32>
    %27 = vector.broadcast %26 : vector<16x1xf32> to vector<16x16xf32>
    %28 = arith.subf %24, %27 : vector<16x16xf32>
    %29 = arith.mulf %28, %9 : vector<16x16xf32>
    %30 = math.exp %29 : vector<16x16xf32>
    %31 = arith.mulf %30, %9 : vector<16x16xf32>
    %cst_19 = arith.constant dense<0.000000e+00> : vector<16xf32>
    %32 = vector.multi_reduction <add>, %31, %cst_19 [1] : vector<16x16xf32> to vector<16xf32>
    %33 = vector.shape_cast %32 : vector<16xf32> to vector<16x1xf32>
    %cst_20 = arith.constant 1.000000e-16 : f32
    %34 = vector.broadcast %cst_20 : f32 to vector<16x1xf32>
    %35 = arith.addf %33, %34 : vector<16x1xf32>
    %36 = tpu.reciprocal %35 {approx = true} : vector<16x1xf32> -> vector<16x1xf32>
    %37 = vector.broadcast %36 : vector<16x1xf32> to vector<16x16xf32>
    %38 = arith.mulf %31, %37 : vector<16x16xf32>
    %39 = arith.truncf %38 : vector<16x16xf32> to vector<16x16xbf16>
    %40 = vector.extract_strided_slice %21 {offsets = [0, 0], sizes = [16, 8], strides = [1, 1]} : vector<16x32xbf16> to vector<16x8xbf16>
    %cst_21 = arith.constant dense<0.000000e+00> : vector<16x8xf32>
    %41 = tpu.matmul %39, %40, %cst_21 {dimension_numbers = #tpu.dot_dimension_numbers<[1], [0], [0], [1], [0, 0, 1, 1], [], []>} : vector<16x16xbf16>, vector<16x8xbf16>, vector<16x8xf32> -> vector<16x8xf32>
    %42 = vector.extract_strided_slice %19 {offsets = [0, 8], sizes = [16, 8], strides = [1, 1]} : vector<16x32xbf16> to vector<16x8xbf16>
    %43 = vector.extract_strided_slice %20 {offsets = [0, 8], sizes = [16, 8], strides = [1, 1]} : vector<16x32xbf16> to vector<16x8xbf16>
    %cst_22 = arith.constant dense<0.000000e+00> : vector<16x16xf32>
    %44 = tpu.matmul %42, %43, %cst_22 {dimension_numbers = #tpu.dot_dimension_numbers<[1], [1], [0], [0], [0, 0, 1, 0], [], []>} : vector<16x8xbf16>, vector<16x8xbf16>, vector<16x16xf32> -> vector<16x16xf32>
    %cst_23 = arith.constant dense<0xFF800000> : vector<16xf32>
    %45 = vector.multi_reduction <maximumf>, %44, %cst_23 [1] : vector<16x16xf32> to vector<16xf32>
    %46 = vector.shape_cast %45 : vector<16xf32> to vector<16x1xf32>
    %47 = vector.broadcast %46 : vector<16x1xf32> to vector<16x16xf32>
    %48 = arith.subf %44, %47 : vector<16x16xf32>
    %49 = arith.mulf %48, %9 : vector<16x16xf32>
    %50 = math.exp %49 : vector<16x16xf32>
    %51 = arith.mulf %50, %9 : vector<16x16xf32>
    %cst_24 = arith.constant dense<0.000000e+00> : vector<16xf32>
    %52 = vector.multi_reduction <add>, %51, %cst_24 [1] : vector<16x16xf32> to vector<16xf32>
    %53 = vector.shape_cast %52 : vector<16xf32> to vector<16x1xf32>
    %cst_25 = arith.constant 1.000000e-16 : f32
    %54 = vector.broadcast %cst_25 : f32 to vector<16x1xf32>
    %55 = arith.addf %53, %54 : vector<16x1xf32>
    %56 = tpu.reciprocal %55 {approx = true} : vector<16x1xf32> -> vector<16x1xf32>
    %57 = vector.broadcast %56 : vector<16x1xf32> to vector<16x16xf32>
    %58 = arith.mulf %51, %57 : vector<16x16xf32>
    %59 = arith.truncf %58 : vector<16x16xf32> to vector<16x16xbf16>
    %60 = vector.extract_strided_slice %21 {offsets = [0, 8], sizes = [16, 8], strides = [1, 1]} : vector<16x32xbf16> to vector<16x8xbf16>
    %cst_26 = arith.constant dense<0.000000e+00> : vector<16x8xf32>
    %61 = tpu.matmul %59, %60, %cst_26 {dimension_numbers = #tpu.dot_dimension_numbers<[1], [0], [0], [1], [0, 0, 1, 1], [], []>} : vector<16x16xbf16>, vector<16x8xbf16>, vector<16x8xf32> -> vector<16x8xf32>
    %62 = vector.extract_strided_slice %19 {offsets = [0, 16], sizes = [16, 8], strides = [1, 1]} : vector<16x32xbf16> to vector<16x8xbf16>
    %63 = vector.extract_strided_slice %20 {offsets = [0, 16], sizes = [16, 8], strides = [1, 1]} : vector<16x32xbf16> to vector<16x8xbf16>
    %cst_27 = arith.constant dense<0.000000e+00> : vector<16x16xf32>
    %64 = tpu.matmul %62, %63, %cst_27 {dimension_numbers = #tpu.dot_dimension_numbers<[1], [1], [0], [0], [0, 0, 1, 0], [], []>} : vector<16x8xbf16>, vector<16x8xbf16>, vector<16x16xf32> -> vector<16x16xf32>
    %cst_28 = arith.constant dense<0xFF800000> : vector<16xf32>
    %65 = vector.multi_reduction <maximumf>, %64, %cst_28 [1] : vector<16x16xf32> to vector<16xf32>
    %66 = vector.shape_cast %65 : vector<16xf32> to vector<16x1xf32>
    %67 = vector.broadcast %66 : vector<16x1xf32> to vector<16x16xf32>
    %68 = arith.subf %64, %67 : vector<16x16xf32>
    %69 = arith.mulf %68, %9 : vector<16x16xf32>
    %70 = math.exp %69 : vector<16x16xf32>
    %71 = arith.mulf %70, %9 : vector<16x16xf32>
    %cst_29 = arith.constant dense<0.000000e+00> : vector<16xf32>
    %72 = vector.multi_reduction <add>, %71, %cst_29 [1] : vector<16x16xf32> to vector<16xf32>
    %73 = vector.shape_cast %72 : vector<16xf32> to vector<16x1xf32>
    %cst_30 = arith.constant 1.000000e-16 : f32
    %74 = vector.broadcast %cst_30 : f32 to vector<16x1xf32>
    %75 = arith.addf %73, %74 : vector<16x1xf32>
    %76 = tpu.reciprocal %75 {approx = true} : vector<16x1xf32> -> vector<16x1xf32>
    %77 = vector.broadcast %76 : vector<16x1xf32> to vector<16x16xf32>
    %78 = arith.mulf %71, %77 : vector<16x16xf32>
    %79 = arith.truncf %78 : vector<16x16xf32> to vector<16x16xbf16>
    %80 = vector.extract_strided_slice %21 {offsets = [0, 16], sizes = [16, 8], strides = [1, 1]} : vector<16x32xbf16> to vector<16x8xbf16>
    %cst_31 = arith.constant dense<0.000000e+00> : vector<16x8xf32>
    %81 = tpu.matmul %79, %80, %cst_31 {dimension_numbers = #tpu.dot_dimension_numbers<[1], [0], [0], [1], [0, 0, 1, 1], [], []>} : vector<16x16xbf16>, vector<16x8xbf16>, vector<16x8xf32> -> vector<16x8xf32>
    %82 = vector.extract_strided_slice %19 {offsets = [0, 24], sizes = [16, 8], strides = [1, 1]} : vector<16x32xbf16> to vector<16x8xbf16>
    %83 = vector.extract_strided_slice %20 {offsets = [0, 24], sizes = [16, 8], strides = [1, 1]} : vector<16x32xbf16> to vector<16x8xbf16>
    %cst_32 = arith.constant dense<0.000000e+00> : vector<16x16xf32>
    %84 = tpu.matmul %82, %83, %cst_32 {dimension_numbers = #tpu.dot_dimension_numbers<[1], [1], [0], [0], [0, 0, 1, 0], [], []>} : vector<16x8xbf16>, vector<16x8xbf16>, vector<16x16xf32> -> vector<16x16xf32>
    %cst_33 = arith.constant dense<0xFF800000> : vector<16xf32>
    %85 = vector.multi_reduction <maximumf>, %84, %cst_33 [1] : vector<16x16xf32> to vector<16xf32>
    %86 = vector.shape_cast %85 : vector<16xf32> to vector<16x1xf32>
    %87 = vector.broadcast %86 : vector<16x1xf32> to vector<16x16xf32>
    %88 = arith.subf %84, %87 : vector<16x16xf32>
    %89 = arith.mulf %88, %9 : vector<16x16xf32>
    %90 = math.exp %89 : vector<16x16xf32>
    %91 = arith.mulf %90, %9 : vector<16x16xf32>
    %cst_34 = arith.constant dense<0.000000e+00> : vector<16xf32>
    %92 = vector.multi_reduction <add>, %91, %cst_34 [1] : vector<16x16xf32> to vector<16xf32>
    %93 = vector.shape_cast %92 : vector<16xf32> to vector<16x1xf32>
    %cst_35 = arith.constant 1.000000e-16 : f32
    %94 = vector.broadcast %cst_35 : f32 to vector<16x1xf32>
    %95 = arith.addf %93, %94 : vector<16x1xf32>
    %96 = tpu.reciprocal %95 {approx = true} : vector<16x1xf32> -> vector<16x1xf32>
    %97 = vector.broadcast %96 : vector<16x1xf32> to vector<16x16xf32>
    %98 = arith.mulf %91, %97 : vector<16x16xf32>
    %99 = arith.truncf %98 : vector<16x16xf32> to vector<16x16xbf16>
    %100 = vector.extract_strided_slice %21 {offsets = [0, 24], sizes = [16, 8], strides = [1, 1]} : vector<16x32xbf16> to vector<16x8xbf16>
    %cst_36 = arith.constant dense<0.000000e+00> : vector<16x8xf32>
    %101 = tpu.matmul %99, %100, %cst_36 {dimension_numbers = #tpu.dot_dimension_numbers<[1], [0], [0], [1], [0, 0, 1, 1], [], []>} : vector<16x16xbf16>, vector<16x8xbf16>, vector<16x8xf32> -> vector<16x8xf32>
    %102 = tpu.concatenate %41, %61, %81, %101 in 1 : vector<16x8xf32>, vector<16x8xf32>, vector<16x8xf32>, vector<16x8xf32> -> vector<16x32xf32>
    %103 = arith.addf %18, %102 : vector<16x32xf32>
    %104 = arith.truncf %103 : vector<16x32xf32> to vector<16x32xbf16>
    %c0_37 = arith.constant 0 : index
    %c0_38 = arith.constant 0 : index
    %105 = vector.load %arg12[%c0_37, %c0_38] : memref<32x32xbf16, #tpu.memory_space<vmem>>, vector<32x32xbf16>
    %cst_39 = arith.constant dense<0.000000e+00> : vector<16x32xf32>
    %106 = tpu.matmul %104, %105, %cst_39 {dimension_numbers = #tpu.dot_dimension_numbers<[1], [0], [0], [1], [0, 0, 1, 1], [], []>} : vector<16x32xbf16>, vector<32x32xbf16>, vector<16x32xf32> -> vector<16x32xf32>
    %c0_40 = arith.constant 0 : index
    %c0_41 = arith.constant 0 : index
    %107 = vector.load %arg13[%c0_40, %c0_41] : memref<1x32xf32, #tpu.memory_space<vmem>>, vector<1x32xf32>
    %108 = vector.broadcast %107 : vector<1x32xf32> to vector<16x32xf32>
    %109 = arith.addf %106, %108 : vector<16x32xf32>
    %110 = vector.broadcast %4 : vector<16x1xf32> to vector<16x32xf32>
    %111 = arith.mulf %109, %110 : vector<16x32xf32>
    %cst_42 = arith.constant 0.000000e+00 : f32
    %112 = vector.broadcast %cst_42 : f32 to vector<16x32xf32>
    %113 = arith.maximumf %111, %112 : vector<16x32xf32>
    %114 = arith.addf %103, %113 : vector<16x32xf32>
    %c0_43 = arith.constant 0 : index
    %c0_44 = arith.constant 0 : index
    %c0_45 = arith.constant 0 : index
    %115 = vector.load %arg14[%c0_43, %c0_44, %c0_45] : memref<1x16x32xf32, #tpu.memory_space<vmem>>, vector<1x16x32xf32>
    %116 = vector.shape_cast %115 : vector<1x16x32xf32> to vector<16x32xf32>
    %117 = vector.shape_cast %114 : vector<16x32xf32> to vector<1x16x32xf32>
    tpu.vector_store %arg14[%c0_43, %c0_44, %c0_45], %117 {strides = array<i32>} : memref<1x16x32xf32, #tpu.memory_space<vmem>>, vector<1x16x32xf32>,
    return
  }
  func.func @transform_0(%arg0: i32, %arg1: i32) -> (i32, i32, i32) {
    %c0_i32 = arith.constant 0 : i32
    %c0_i32_0 = arith.constant 0 : i32
    return %arg0, %arg1, %c0_i32 : i32, i32, i32
  }
  func.func @transform_1(%arg0: i32, %arg1: i32) -> (i32, i32, i32) {
    %c0_i32 = arith.constant 0 : i32
    %c0_i32_0 = arith.constant 0 : i32
    %c0_i32_1 = arith.constant 0 : i32
    return %arg0, %c0_i32, %c0_i32_0 : i32, i32, i32
  }
  func.func @transform_2(%arg0: i32, %arg1: i32) -> (i32, i32, i32) {
    %c0_i32 = arith.constant 0 : i32
    %c0_i32_0 = arith.constant 0 : i32
    return %arg0, %arg1, %c0_i32 : i32, i32, i32
  }
  func.func @transform_3(%arg0: i32, %arg1: i32) -> (i32, i32, i32) {
    %c0_i32 = arith.constant 0 : i32
    %c0_i32_0 = arith.constant 0 : i32
    %c0_i32_1 = arith.constant 0 : i32
    return %arg0, %c0_i32, %c0_i32_0 : i32, i32, i32
  }
  func.func @transform_4(%arg0: i32, %arg1: i32) -> (i32, i32) {
    %c0_i32 = arith.constant 0 : i32
    %c0_i32_0 = arith.constant 0 : i32
    %c0_i32_1 = arith.constant 0 : i32
    return %c0_i32, %c0_i32_0 : i32, i32
  }
  func.func @transform_5(%arg0: i32, %arg1: i32) -> (i32, i32) {
    %c0_i32 = arith.constant 0 : i32
    %c0_i32_0 = arith.constant 0 : i32
    %c0_i32_1 = arith.constant 0 : i32
    return %c0_i32, %c0_i32_0 : i32, i32
  }
  func.func @transform_6(%arg0: i32, %arg1: i32) -> (i32, i32) {
    %c0_i32 = arith.constant 0 : i32
    %c0_i32_0 = arith.constant 0 : i32
    %c0_i32_1 = arith.constant 0 : i32
    return %c0_i32, %c0_i32_0 : i32, i32
  }
  func.func @transform_7(%arg0: i32, %arg1: i32) -> (i32, i32) {
    %c0_i32 = arith.constant 0 : i32
    %c0_i32_0 = arith.constant 0 : i32
    %c0_i32_1 = arith.constant 0 : i32
    return %c0_i32, %c0_i32_0 : i32, i32
  }
  func.func @transform_8(%arg0: i32, %arg1: i32) -> (i32, i32) {
    %c0_i32 = arith.constant 0 : i32
    %c0_i32_0 = arith.constant 0 : i32
    %c0_i32_1 = arith.constant 0 : i32
    return %c0_i32, %c0_i32_0 : i32, i32
  }
  func.func @transform_9(%arg0: i32, %arg1: i32) -> (i32, i32) {
    %c0_i32 = arith.constant 0 : i32
    %c0_i32_0 = arith.constant 0 : i32
    %c0_i32_1 = arith.constant 0 : i32
    return %c0_i32, %c0_i32_0 : i32, i32
  }
  func.func @transform_10(%arg0: i32, %arg1: i32) -> (i32, i32) {
    %c0_i32 = arith.constant 0 : i32
    %c0_i32_0 = arith.constant 0 : i32
    %c0_i32_1 = arith.constant 0 : i32
    return %c0_i32, %c0_i32_0 : i32, i32
  }
  func.func @transform_11(%arg0: i32, %arg1: i32) -> (i32, i32) {
    %c0_i32 = arith.constant 0 : i32
    %c0_i32_0 = arith.constant 0 : i32
    %c0_i32_1 = arith.constant 0 : i32
    return %c0_i32, %c0_i32_0 : i32, i32
  }
  func.func @transform_12(%arg0: i32, %arg1: i32) -> (i32, i32, i32) {
    %c0_i32 = arith.constant 0 : i32
    %c0_i32_0 = arith.constant 0 : i32
    return %arg0, %arg1, %c0_i32 : i32, i32, i32
  }
}

</mosaic_0001>

<llo_original>
// kernel: tpu_custom_call.1
$region0: #{tpu_custom_call.1}
  #allocation0 [shape = 'u32[]', space=smem, size = 0x4, offset = 0x4, fixed_abs, tag = 'smem constant byte address 0x4 - core index']
  #allocation1 [shape = 'u32[144,128]{1,0:T(1,128)}', space=vmem, size = 0x12000, scoped, tag = 'internal scratch']
  #allocation2 [shape = 'bf16[16,32]{1,0:T(16,128)(2,1)}', space=vmem, size = 0x1000, scoped, tag = 'scratch operand']
  #allocation3 [shape = 'bf16[16,32]{1,0:T(16,128)(2,1)}', space=vmem, size = 0x1000, scoped, tag = 'scratch operand']
  %s0 = inlined_call_operand.vmem [shape: bf16[2,16,16], index: 0, kind: input, shape index: {}]
  %s1 = inlined_call_operand.vmem [shape: bf16[2,16,16], index: 1, kind: input, shape index: {}]
  %s2 = inlined_call_operand.vmem [shape: f32[2,16,1], index: 2, kind: input, shape index: {}]
  %s3 = inlined_call_operand.hbm [shape: f32[2,1,16], index: 3, kind: input, shape index: {}]
  %s4 = inlined_call_operand.hbm [shape: bf16[16,32], index: 4, kind: input, shape index: {}]
  %s5 = inlined_call_operand.hbm [shape: f32[1,32], index: 5, kind: input, shape index: {}]
  %s6 = inlined_call_operand.vmem [shape: bf16[16,32], index: 6, kind: input, shape index: {}]
  %s7 = inlined_call_operand.hbm [shape: f32[1,32], index: 7, kind: input, shape index: {}]
  %s8 = inlined_call_operand.vmem [shape: bf16[16,32], index: 8, kind: input, shape index: {}]
  %s9 = inlined_call_operand.vmem [shape: f32[1,32], index: 9, kind: input, shape index: {}]
  %s10 = inlined_call_operand.vmem [shape: bf16[32,32], index: 10, kind: input, shape index: {}]
  %s11 = inlined_call_operand.vmem [shape: f32[1,32], index: 11, kind: input, shape index: {}]
  %s12 = inlined_call_operand.hbm [shape: f32[2,16,32], index: 12, kind: output, shape index: {}]
  %s13 = sld [smem:[#allocation0]]
  $region101: #{tpu_custom_call.1} parent=0
    _
  %s15 = ssub.s32 1, %s13
  %s16 = scalar_select 0, %s15, %s13
  $region1: #{tpu_custom_call.1} parent=0
    #allocation4 [shape = 'u8[1024]{0}', space=vmem, size = 0x400, scoped, tag = 'input window, operand 3']
    #allocation5 [shape = 's32[2]{0}', space=sflag, size = 0x8, scoped, tag = 'scoped memory for tpu_custom_call.1']
    #allocation6 [shape = 's32[2]{0}', space=sflag, size = 0x8, scoped, tag = 'scoped memory for tpu_custom_call.1']
    #allocation7 [shape = 'u8[4096]{0}', space=vmem, size = 0x1000, scoped, tag = 'input window, operand 4, single buffered']
    #allocation8 [shape = 's32[1]{0}', space=sflag, size = 0x4, scoped, tag = 'scoped memory for tpu_custom_call.1']
    #allocation9 [shape = 'u8[512]{0}', space=vmem, size = 0x400, scoped, tag = 'input window, operand 5, single buffered']
    #allocation10 [shape = 'u8[512]{0}', space=vmem, size = 0x400, scoped, tag = 'input window, operand 7, single buffered']
    #allocation11 [shape = 's32[1]{0}', space=sflag, size = 0x4, scoped, tag = 'scoped memory for tpu_custom_call.1']
    #allocation12 [shape = 'u8[16384]{0}', space=vmem, size = 0x4000, scoped, tag = 'output window, operand 0']
    %17 = vsyncpa [#allocation5], 0
    %s18 = scalar_lea.sflag [#allocation5], 1
    %19 = vsyncpa %s18, 0
    %20 = vsyncpa [#allocation8], 0
    %21 = vsyncpa [#allocation11], 0
    %22 = vsyncpa [#allocation6], 0
    %s23 = scalar_lea.sflag [#allocation6], 1
    %24 = vsyncpa %s23, 0
    loop: start=0, step=1, limit=4
    $region2: #{tpu_custom_call.1} parent=1 // loop_pre_header
      _
    $region3: #{tpu_custom_call.1} parent=1 // loop_header
      %s26 = sphi 0, %s30
      %p27 = scmp.ge.s32.totalorder %s26, 4
      %s33 = sphi 0, %s45
      %s34 = sphi 0, %s41
      %s35 = sphi 0, %s33
      %s36 = sphi 0, %s34
      %s37 = sphi 0, %s35
      %s38 = sphi 0, %s36
      %s50 = sphi 0, %s52
      %s53 = sphi 0, %s50
      %s54 = sphi 0, %s53
      %s70 = sphi 0, %s54
      %s76 = sphi 0, %s78
      %s79 = sphi 0, %s76
      %s80 = sphi 0, %s79
      %s96 = sphi 0, %s80
      %s104 = sphi 0, %s106
      %s107 = sphi 0, %s104
      %s108 = sphi 0, %s107
      %s124 = sphi 0, %s108
      %s130 = sphi 0, %s132
      %s133 = sphi 0, %s130
      %s134 = sphi 0, %s133
      %s150 = sphi 0, %s134
      %s154 = sphi 0, %s154
      %s156 = sphi 0, %s154
      %s157 = sphi 0, %s156
      %s171 = sphi 0, %s157
      %s175 = sphi 0, %s175
      %s177 = sphi 0, %s175
      %s178 = sphi 0, %s177
      %s192 = sphi 0, %s178
      %s196 = sphi 0, %s196
      %s198 = sphi 0, %s196
      %s199 = sphi 0, %s198
      %s213 = sphi 0, %s199
      %s217 = sphi 0, %s217
      %s219 = sphi 0, %s217
      %s220 = sphi 0, %s219
      %s234 = sphi 0, %s220
      %s238 = sphi 0, %s238
      %s240 = sphi 0, %s238
      %s241 = sphi 0, %s240
      %s255 = sphi 0, %s241
      %s259 = sphi 0, %s259
      %s261 = sphi 0, %s259
      %s262 = sphi 0, %s261
      %s276 = sphi 0, %s262
      %s280 = sphi 0, %s280
      %s282 = sphi 0, %s280
      %s283 = sphi 0, %s282
      %s297 = sphi 0, %s283
      %s301 = sphi 0, %s301
      %s303 = sphi 0, %s301
      %s304 = sphi 0, %s303
      %s318 = sphi 0, %s304
      %s326 = sphi 0, %s328
      %s329 = sphi 0, %s326
      %s330 = sphi 0, %s329
      %s346 = sphi 0, %s330
    $region4: #{tpu_custom_call.1} parent=1 // loop_header_branch
      %29 = sbr.rel (%p27) target = $region8
    $region5: #{tpu_custom_call.1} parent=1 // loop_body
      %s31 = ssub.s32 %s26, 1
      %s32 = ssub.s32 %s26, 2
      %s39 = sadd.s32 1, %s34
      %p40 = scmp.ge.s32.totalorder %s39, 1
      %s41 = scalar_select %p40, 0, %s39
      %s42 = sadd.s32 1, %s33
      %s43 = scalar_select %p40, %s42, %s33
      %p44 = scmp.ge.s32.totalorder %s43, 2
      %s45 = scalar_select %p44, 0, %s43
      %s46 = ssub.s32 %s33, %s45
      %s47 = ssub.s32 %s34, %s41
      %s48 = sor.u32 %s46, %s47
      %p49 = scmp.eq.s32.totalorder %s48, 0
      %s51 = sadd.s32 %s50, 1
      %s52 = scalar_select %p49, %s50, %s51
      %p55 = pneg %p49
      %p56 = scmp.eq.s32.totalorder %s26, 1
      %p57 = por %p55, %p56
      %p58 = scmp.ne.s32.totalorder %s50, %s53
      %p59 = scmp.eq.s32.totalorder %s26, 0
      %p60 = por %p58, %p59
      %p61 = scmp.ne.s32.totalorder %s50, %s53
      %p62 = scmp.eq.s32.totalorder %s31, 1
      %p63 = por %p61, %p62
      %p64 = scmp.ne.s32.totalorder %s53, %s54
      %p65 = scmp.eq.s32.totalorder %s31, 0
      %p66 = por %p64, %p65
      %p67 = scmp.ne.s32.totalorder %s53, %s54
      %p68 = scmp.eq.s32.totalorder %s32, 1
      %p69 = por %p67, %p68
      %p71 = scmp.ne.s32.totalorder %s54, %s70
      %p72 = scmp.eq.s32.totalorder %s32, 0
      %p73 = por %p71, %p72
      %s74 = ssub.s32 %s33, %s45
      %p75 = scmp.eq.s32.totalorder %s74, 0
      %s77 = sadd.s32 %s76, 1
      %s78 = scalar_select %p75, %s76, %s77
      %p81 = pneg %p75
      %p82 = scmp.eq.s32.totalorder %s26, 1
      %p83 = por %p81, %p82
      %p84 = scmp.ne.s32.totalorder %s76, %s79
      %p85 = scmp.eq.s32.totalorder %s26, 0
      %p86 = por %p84, %p85
      %p87 = scmp.ne.s32.totalorder %s76, %s79
      %p88 = scmp.eq.s32.totalorder %s31, 1
      %p89 = por %p87, %p88
      %p90 = scmp.ne.s32.totalorder %s79, %s80
      %p91 = scmp.eq.s32.totalorder %s31, 0
      %p92 = por %p90, %p91
      %p93 = scmp.ne.s32.totalorder %s79, %s80
      %p94 = scmp.eq.s32.totalorder %s32, 1
      %p95 = por %p93, %p94
      %p97 = scmp.ne.s32.totalorder %s80, %s96
      %p98 = scmp.eq.s32.totalorder %s32, 0
      %p99 = por %p97, %p98
      %s100 = ssub.s32 %s33, %s45
      %s101 = ssub.s32 %s34, %s41
      %s102 = sor.u32 %s100, %s101
      %p103 = scmp.eq.s32.totalorder %s102, 0
      %s105 = sadd.s32 %s104, 1
      %s106 = scalar_select %p103, %s104, %s105
      %p109 = pneg %p103
      %p110 = scmp.eq.s32.totalorder %s26, 1
      %p111 = por %p109, %p110
      %p112 = scmp.ne.s32.totalorder %s104, %s107
      %p113 = scmp.eq.s32.totalorder %s26, 0
      %p114 = por %p112, %p113
      %p115 = scmp.ne.s32.totalorder %s104, %s107
      %p116 = scmp.eq.s32.totalorder %s31, 1
      %p117 = por %p115, %p116
      %p118 = scmp.ne.s32.totalorder %s107, %s108
      %p119 = scmp.eq.s32.totalorder %s31, 0
      %p120 = por %p118, %p119
      %p121 = scmp.ne.s32.totalorder %s107, %s108
      %p122 = scmp.eq.s32.totalorder %s32, 1
      %p123 = por %p121, %p122
      %p125 = scmp.ne.s32.totalorder %s108, %s124
      %p126 = scmp.eq.s32.totalorder %s32, 0
      %p127 = por %p125, %p126
      %s128 = ssub.s32 %s33, %s45
      %p129 = scmp.eq.s32.totalorder %s128, 0
      %s131 = sadd.s32 %s130, 1
      %s132 = scalar_select %p129, %s130, %s131
      %p135 = pneg %p129
      %p136 = scmp.eq.s32.totalorder %s26, 1
      %p137 = por %p135, %p136
      %p138 = scmp.ne.s32.totalorder %s130, %s133
      %p139 = scmp.eq.s32.totalorder %s26, 0
      %p140 = por %p138, %p139
      %p141 = scmp.ne.s32.totalorder %s130, %s133
      %p142 = scmp.eq.s32.totalorder %s31, 1
      %p143 = por %p141, %p142
      %p144 = scmp.ne.s32.totalorder %s133, %s134
      %p145 = scmp.eq.s32.totalorder %s31, 0
      %p146 = por %p144, %p145
      %p147 = scmp.ne.s32.totalorder %s133, %s134
      %p148 = scmp.eq.s32.totalorder %s32, 1
      %p149 = por %p147, %p148
      %p151 = scmp.ne.s32.totalorder %s134, %s150
      %p152 = scmp.eq.s32.totalorder %s32, 0
      %p153 = por %p151, %p152
      %s155 = sadd.s32 %s154, 1
      %p158 = scmp.eq.s32.totalorder %s26, 1
      %p159 = scmp.ne.s32.totalorder %s154, %s156
      %p160 = scmp.eq.s32.totalorder %s26, 0
      %p161 = por %p159, %p160
      %p162 = scmp.ne.s32.totalorder %s154, %s156
      %p163 = scmp.eq.s32.totalorder %s31, 1
      %p164 = por %p162, %p163
      %p165 = scmp.ne.s32.totalorder %s156, %s157
      %p166 = scmp.eq.s32.totalorder %s31, 0
      %p167 = por %p165, %p166
      %p168 = scmp.ne.s32.totalorder %s156, %s157
      %p169 = scmp.eq.s32.totalorder %s32, 1
      %p170 = por %p168, %p169
      %p172 = scmp.ne.s32.totalorder %s157, %s171
      %p173 = scmp.eq.s32.totalorder %s32, 0
      %p174 = por %p172, %p173
      %s176 = sadd.s32 %s175, 1
      %p179 = scmp.eq.s32.totalorder %s26, 1
      %p180 = scmp.ne.s32.totalorder %s175, %s177
      %p181 = scmp.eq.s32.totalorder %s26, 0
      %p182 = por %p180, %p181
      %p183 = scmp.ne.s32.totalorder %s175, %s177
      %p184 = scmp.eq.s32.totalorder %s31, 1
      %p185 = por %p183, %p184
      %p186 = scmp.ne.s32.totalorder %s177, %s178
      %p187 = scmp.eq.s32.totalorder %s31, 0
      %p188 = por %p186, %p187
      %p189 = scmp.ne.s32.totalorder %s177, %s178
      %p190 = scmp.eq.s32.totalorder %s32, 1
      %p191 = por %p189, %p190
      %p193 = scmp.ne.s32.totalorder %s178, %s192
      %p194 = scmp.eq.s32.totalorder %s32, 0
      %p195 = por %p193, %p194
      %s197 = sadd.s32 %s196, 1
      %p200 = scmp.eq.s32.totalorder %s26, 1
      %p201 = scmp.ne.s32.totalorder %s196, %s198
      %p202 = scmp.eq.s32.totalorder %s26, 0
      %p203 = por %p201, %p202
      %p204 = scmp.ne.s32.totalorder %s196, %s198
      %p205 = scmp.eq.s32.totalorder %s31, 1
      %p206 = por %p204, %p205
      %p207 = scmp.ne.s32.totalorder %s198, %s199
      %p208 = scmp.eq.s32.totalorder %s31, 0
      %p209 = por %p207, %p208
      %p210 = scmp.ne.s32.totalorder %s198, %s199
      %p211 = scmp.eq.s32.totalorder %s32, 1
      %p212 = por %p210, %p211
      %p214 = scmp.ne.s32.totalorder %s199, %s213
      %p215 = scmp.eq.s32.totalorder %s32, 0
      %p216 = por %p214, %p215
      %s218 = sadd.s32 %s217, 1
      %p221 = scmp.eq.s32.totalorder %s26, 1
      %p222 = scmp.ne.s32.totalorder %s217, %s219
      %p223 = scmp.eq.s32.totalorder %s26, 0
      %p224 = por %p222, %p223
      %p225 = scmp.ne.s32.totalorder %s217, %s219
      %p226 = scmp.eq.s32.totalorder %s31, 1
      %p227 = por %p225, %p226
      %p228 = scmp.ne.s32.totalorder %s219, %s220
      %p229 = scmp.eq.s32.totalorder %s31, 0
      %p230 = por %p228, %p229
      %p231 = scmp.ne.s32.totalorder %s219, %s220
      %p232 = scmp.eq.s32.totalorder %s32, 1
      %p233 = por %p231, %p232
      %p235 = scmp.ne.s32.totalorder %s220, %s234
      %p236 = scmp.eq.s32.totalorder %s32, 0
      %p237 = por %p235, %p236
      %s239 = sadd.s32 %s238, 1
      %p242 = scmp.eq.s32.totalorder %s26, 1
      %p243 = scmp.ne.s32.totalorder %s238, %s240
      %p244 = scmp.eq.s32.totalorder %s26, 0
      %p245 = por %p243, %p244
      %p246 = scmp.ne.s32.totalorder %s238, %s240
      %p247 = scmp.eq.s32.totalorder %s31, 1
      %p248 = por %p246, %p247
      %p249 = scmp.ne.s32.totalorder %s240, %s241
      %p250 = scmp.eq.s32.totalorder %s31, 0
      %p251 = por %p249, %p250
      %p252 = scmp.ne.s32.totalorder %s240, %s241
      %p253 = scmp.eq.s32.totalorder %s32, 1
      %p254 = por %p252, %p253
      %p256 = scmp.ne.s32.totalorder %s241, %s255
      %p257 = scmp.eq.s32.totalorder %s32, 0
      %p258 = por %p256, %p257
      %s260 = sadd.s32 %s259, 1
      %p263 = scmp.eq.s32.totalorder %s26, 1
      %p264 = scmp.ne.s32.totalorder %s259, %s261
      %p265 = scmp.eq.s32.totalorder %s26, 0
      %p266 = por %p264, %p265
      %p267 = scmp.ne.s32.totalorder %s259, %s261
      %p268 = scmp.eq.s32.totalorder %s31, 1
      %p269 = por %p267, %p268
      %p270 = scmp.ne.s32.totalorder %s261, %s262
      %p271 = scmp.eq.s32.totalorder %s31, 0
      %p272 = por %p270, %p271
      %p273 = scmp.ne.s32.totalorder %s261, %s262
      %p274 = scmp.eq.s32.totalorder %s32, 1
      %p275 = por %p273, %p274
      %p277 = scmp.ne.s32.totalorder %s262, %s276
      %p278 = scmp.eq.s32.totalorder %s32, 0
      %p279 = por %p277, %p278
      %s281 = sadd.s32 %s280, 1
      %p284 = scmp.eq.s32.totalorder %s26, 1
      %p285 = scmp.ne.s32.totalorder %s280, %s282
      %p286 = scmp.eq.s32.totalorder %s26, 0
      %p287 = por %p285, %p286
      %p288 = scmp.ne.s32.totalorder %s280, %s282
      %p289 = scmp.eq.s32.totalorder %s31, 1
      %p290 = por %p288, %p289
      %p291 = scmp.ne.s32.totalorder %s282, %s283
      %p292 = scmp.eq.s32.totalorder %s31, 0
      %p293 = por %p291, %p292
      %p294 = scmp.ne.s32.totalorder %s282, %s283
      %p295 = scmp.eq.s32.totalorder %s32, 1
      %p296 = por %p294, %p295
      %p298 = scmp.ne.s32.totalorder %s283, %s297
      %p299 = scmp.eq.s32.totalorder %s32, 0
      %p300 = por %p298, %p299
      %s302 = sadd.s32 %s301, 1
      %p305 = scmp.eq.s32.totalorder %s26, 1
      %p306 = scmp.ne.s32.totalorder %s301, %s303
      %p307 = scmp.eq.s32.totalorder %s26, 0
      %p308 = por %p306, %p307
      %p309 = scmp.ne.s32.totalorder %s301, %s303
      %p310 = scmp.eq.s32.totalorder %s31, 1
      %p311 = por %p309, %p310
      %p312 = scmp.ne.s32.totalorder %s303, %s304
      %p313 = scmp.eq.s32.totalorder %s31, 0
      %p314 = por %p312, %p313
      %p315 = scmp.ne.s32.totalorder %s303, %s304
      %p316 = scmp.eq.s32.totalorder %s32, 1
      %p317 = por %p315, %p316
      %p319 = scmp.ne.s32.totalorder %s304, %s318
      %p320 = scmp.eq.s32.totalorder %s32, 0
      %p321 = por %p319, %p320
      %s322 = ssub.s32 %s33, %s45
      %s323 = ssub.s32 %s34, %s41
      %s324 = sor.u32 %s322, %s323
      %p325 = scmp.eq.s32.totalorder %s324, 0
      %s327 = sadd.s32 %s326, 1
      %s328 = scalar_select %p325, %s326, %s327
      %p331 = pneg %p325
      %p332 = scmp.eq.s32.totalorder %s26, 1
      %p333 = por %p331, %p332
      %p334 = scmp.ne.s32.totalorder %s326, %s329
      %p335 = scmp.eq.s32.totalorder %s26, 0
      %p336 = por %p334, %p335
      %p337 = scmp.ne.s32.totalorder %s326, %s329
      %p338 = scmp.eq.s32.totalorder %s31, 1
      %p339 = por %p337, %p338
      %p340 = scmp.ne.s32.totalorder %s329, %s330
      %p341 = scmp.eq.s32.totalorder %s31, 0
      %p342 = por %p340, %p341
      %p343 = scmp.ne.s32.totalorder %s329, %s330
      %p344 = scmp.eq.s32.totalorder %s32, 1
      %p345 = por %p343, %p344
      %p347 = scmp.ne.s32.totalorder %s330, %s346
      %p348 = scmp.eq.s32.totalorder %s32, 0
      %p349 = por %p347, %p348
      %p350 = scmp.le.s32.totalorder 1, %s26
      %p351 = scmp.lt.s32.totalorder %s26, 3
      %p352 = pnand %p350, %p351
      %p353 = pneg %p352
      // Predicated region
      $region9: #{tpu_custom_call.1} parent=5 // pred_check
        _
      $region10: #{tpu_custom_call.1} parent=5 // pred_check_branch
        %355 = sbr.rel (%p352) target = $region12
      $region11: #{tpu_custom_call.1} parent=5 // pred_region
        %s356 = ssub.s32 %s26, 1
        // Predicated region
        $region13: #{tpu_custom_call.1} parent=11 // pred_check
          %p357 = pneg %p167
        $region14: #{tpu_custom_call.1} parent=11 // pred_check_branch
          %359 = sbr.rel (%p357) target = $region16
        $region15: #{tpu_custom_call.1} parent=11 // pred_region
          %s361 = ssub.s32 128, 128
          %362 = vsyncadd [#allocation8], %s361
          %s363 = sshll.u32 [#allocation7], 4
          %s364 = int_to_ptr.vmem [resolvable:$true] %s363
          %369 = dma.hbm_to_vmem [thread:$0]  %s4, 128, %s364, [#allocation8], 64, 64, 4
        $region16: #{tpu_custom_call.1} parent=11 // pred_fallthru
          _
        // Predicated region
        $region17: #{tpu_custom_call.1} parent=11 // pred_check
          %p370 = pneg %p188
        $region18: #{tpu_custom_call.1} parent=11 // pred_check_branch
          %372 = sbr.rel (%p370) target = $region20
        $region19: #{tpu_custom_call.1} parent=11 // pred_region
          %s374 = ssub.s32 16, 16
          %375 = vsyncadd [#allocation8], %s374
          %s377 = sshll.u32 [#allocation9], 4
          %s378 = int_to_ptr.vmem [resolvable:$true] %s377
          %380 = dma.hbm_to_vmem [thread:$0]  %s5, 16, %s378, [#allocation8]
        $region20: #{tpu_custom_call.1} parent=11 // pred_fallthru
          _
        // Predicated region
        $region21: #{tpu_custom_call.1} parent=11 // pred_check
          %p381 = pneg %p209
        $region22: #{tpu_custom_call.1} parent=11 // pred_check_branch
          %383 = sbr.rel (%p381) target = $region24
        $region23: #{tpu_custom_call.1} parent=11 // pred_region
          _
        $region24: #{tpu_custom_call.1} parent=11 // pred_fallthru
          _
        // Predicated region
        $region25: #{tpu_custom_call.1} parent=11 // pred_check
          %p384 = pneg %p230
        $region26: #{tpu_custom_call.1} parent=11 // pred_check_branch
          %386 = sbr.rel (%p384) target = $region28
        $region27: #{tpu_custom_call.1} parent=11 // pred_region
          %s388 = ssub.s32 16, 16
          %389 = vsyncadd [#allocation11], %s388
          %s391 = sshll.u32 [#allocation10], 4
          %s392 = int_to_ptr.vmem [resolvable:$true] %s391
          %394 = dma.hbm_to_vmem [thread:$0]  %s7, 16, %s392, [#allocation11]
        $region28: #{tpu_custom_call.1} parent=11 // pred_fallthru
          _
        // Predicated region
        $region29: #{tpu_custom_call.1} parent=11 // pred_check
          %p395 = pneg %p251
        $region30: #{tpu_custom_call.1} parent=11 // pred_check_branch
          %397 = sbr.rel (%p395) target = $region32
        $region31: #{tpu_custom_call.1} parent=11 // pred_region
          _
        $region32: #{tpu_custom_call.1} parent=11 // pred_fallthru
          _
        // Predicated region
        $region33: #{tpu_custom_call.1} parent=11 // pred_check
          %p398 = pneg %p272
        $region34: #{tpu_custom_call.1} parent=11 // pred_check_branch
          %400 = sbr.rel (%p398) target = $region36
        $region35: #{tpu_custom_call.1} parent=11 // pred_region
          _
        $region36: #{tpu_custom_call.1} parent=11 // pred_fallthru
          _
        // Predicated region
        $region37: #{tpu_custom_call.1} parent=11 // pred_check
          %p401 = pneg %p293
        $region38: #{tpu_custom_call.1} parent=11 // pred_check_branch
          %403 = sbr.rel (%p401) target = $region40
        $region39: #{tpu_custom_call.1} parent=11 // pred_region
          _
        $region40: #{tpu_custom_call.1} parent=11 // pred_fallthru
          _
        // Predicated region
        $region41: #{tpu_custom_call.1} parent=11 // pred_check
          %p404 = pneg %p314
        $region42: #{tpu_custom_call.1} parent=11 // pred_check_branch
          %406 = sbr.rel (%p404) target = $region44
        $region43: #{tpu_custom_call.1} parent=11 // pred_region
          _
        $region44: #{tpu_custom_call.1} parent=11 // pred_fallthru
          _
      $region12: #{tpu_custom_call.1} parent=5 // pred_fallthru
        _
      %p407 = scmp.lt.s32.totalorder %s26, 2
      // Predicated region
      $region45: #{tpu_custom_call.1} parent=5 // pred_check
        %p408 = pneg %p407
      $region46: #{tpu_custom_call.1} parent=5 // pred_check_branch
        %410 = sbr.rel (%p408) target = $region48
      $region47: #{tpu_custom_call.1} parent=5 // pred_region
        // Predicated region
        $region49: #{tpu_custom_call.1} parent=47 // pred_check
          %p411 = pneg %p60
        $region50: #{tpu_custom_call.1} parent=47 // pred_check_branch
          %413 = sbr.rel (%p411) target = $region52
        $region51: #{tpu_custom_call.1} parent=47 // pred_region
          %s414 = smul.u32 2, %s34
          %p415 = scmp.lt.s32.totalorder %s33, 1
          %s416 = scalar_select %p415, %s33, 1
          %p417 = scmp.lt.s32.totalorder %s414, 1
          %s418 = scalar_select %p417, %s414, 1
          %s419 = smul.addr %s416, 2
          %s420 = sadd.s32 %s418, %s419
          %s421 = smul.addr %s420, 4
          %s422 = scalar_lea.vmem %s0, %s421
          %s423 = smul.u32 2, %s34
        $region52: #{tpu_custom_call.1} parent=47 // pred_fallthru
          _
        // Predicated region
        $region53: #{tpu_custom_call.1} parent=47 // pred_check
          %p424 = pneg %p86
        $region54: #{tpu_custom_call.1} parent=47 // pred_check_branch
          %426 = sbr.rel (%p424) target = $region56
        $region55: #{tpu_custom_call.1} parent=47 // pred_region
          %p427 = scmp.lt.s32.totalorder %s33, 1
          %s428 = scalar_select %p427, %s33, 1
          %s429 = smul.addr %s428, 2
          %s430 = smul.addr %s429, 4
          %s431 = scalar_lea.vmem %s1, %s430
        $region56: #{tpu_custom_call.1} parent=47 // pred_fallthru
          _
        // Predicated region
        $region57: #{tpu_custom_call.1} parent=47 // pred_check
          %p432 = pneg %p114
        $region58: #{tpu_custom_call.1} parent=47 // pred_check_branch
          %434 = sbr.rel (%p432) target = $region60
        $region59: #{tpu_custom_call.1} parent=47 // pred_region
          %s435 = smul.u32 2, %s34
          %p436 = scmp.lt.s32.totalorder %s33, 1
          %s437 = scalar_select %p436, %s33, 1
          %p438 = scmp.lt.s32.totalorder %s435, 1
          %s439 = scalar_select %p438, %s435, 1
          %s440 = smul.addr %s437, 2
          %s441 = sadd.s32 %s439, %s440
          %s442 = smul.addr %s441, 8
          %s443 = scalar_lea.vmem %s2, %s442
          %s444 = smul.u32 2, %s34
        $region60: #{tpu_custom_call.1} parent=47 // pred_fallthru
          _
        // Predicated region
        $region61: #{tpu_custom_call.1} parent=47 // pred_check
          %p445 = pneg %p140
        $region62: #{tpu_custom_call.1} parent=47 // pred_check_branch
          %447 = sbr.rel (%p445) target = $region64
        $region63: #{tpu_custom_call.1} parent=47 // pred_region
          %s448 = sand.u32 %s130, 1
          %s449 = scalar_lea.sflag [#allocation5], %s448
          %s450 = sand.u32 %s130, 1
          %s451 = scalar_lea.vmem [#allocation4], %s450
          %s453 = ssub.s32 16, 16
          %454 = vsyncadd %s449, %s453
          %s455 = smul.addr %s33, 16
          %s456 = scalar_lea.hbm %s3, %s455
          %s458 = sshll.u32 %s451, 4
          %s459 = int_to_ptr.vmem [resolvable:$true] %s458
          %461 = dma.hbm_to_vmem [thread:$0]  %s456, 16, %s459, %s449
        $region64: #{tpu_custom_call.1} parent=47 // pred_fallthru
          _
      $region48: #{tpu_custom_call.1} parent=5 // pred_fallthru
        _
      %p462 = scmp.le.s32.totalorder 1, %s26
      %p463 = scmp.lt.s32.totalorder %s26, 3
      %p464 = pnand %p462, %p463
      %p465 = pneg %p464
      // Predicated region
      $region65: #{tpu_custom_call.1} parent=5 // pred_check
        _
      $region66: #{tpu_custom_call.1} parent=5 // pred_check_branch
        %467 = sbr.rel (%p464) target = $region68
      $region67: #{tpu_custom_call.1} parent=5 // pred_region
        %s468 = ssub.s32 %s26, 1
        %s469 = sand.u32 %s133, 1
        %s470 = scalar_lea.sflag [#allocation5], %s469
        %s471 = sand.u32 %s133, 1
        %s472 = scalar_lea.vmem [#allocation4], %s471
        // Predicated region
        $region69: #{tpu_custom_call.1} parent=67 // pred_check
          %p473 = pneg %p146
        $region70: #{tpu_custom_call.1} parent=67 // pred_check_branch
          %475 = sbr.rel (%p473) target = $region72
        $region71: #{tpu_custom_call.1} parent=67 // pred_region
          %476 = dma.done %s470, 16
        $region72: #{tpu_custom_call.1} parent=67 // pred_fallthru
          _
        // Predicated region
        $region73: #{tpu_custom_call.1} parent=67 // pred_check
          %p477 = pneg %p167
        $region74: #{tpu_custom_call.1} parent=67 // pred_check_branch
          %479 = sbr.rel (%p477) target = $region76
        $region75: #{tpu_custom_call.1} parent=67 // pred_region
          %480 = dma.done [#allocation8], 128
        $region76: #{tpu_custom_call.1} parent=67 // pred_fallthru
          _
        // Predicated region
        $region77: #{tpu_custom_call.1} parent=67 // pred_check
          %p481 = pneg %p188
        $region78: #{tpu_custom_call.1} parent=67 // pred_check_branch
          %483 = sbr.rel (%p481) target = $region80
        $region79: #{tpu_custom_call.1} parent=67 // pred_region
          %484 = dma.done [#allocation8], 16
        $region80: #{tpu_custom_call.1} parent=67 // pred_fallthru
          _
        // Predicated region
        $region81: #{tpu_custom_call.1} parent=67 // pred_check
          %p485 = pneg %p230
        $region82: #{tpu_custom_call.1} parent=67 // pred_check_branch
          %487 = sbr.rel (%p485) target = $region84
        $region83: #{tpu_custom_call.1} parent=67 // pred_region
          %488 = dma.done [#allocation11], 16
        $region84: #{tpu_custom_call.1} parent=67 // pred_fallthru
          _
        %s489 = smul.u32 2, %s36
        %p490 = scmp.lt.s32.totalorder %s35, 1
        %s491 = scalar_select %p490, %s35, 1
        %p492 = scmp.lt.s32.totalorder %s489, 1
        %s493 = scalar_select %p492, %s489, 1
        %s494 = smul.addr %s491, 2
        %s495 = sadd.s32 %s493, %s494
        %s496 = smul.addr %s495, 4
        %s497 = scalar_lea.vmem %s0, %s496
        %p498 = pneg %p66
        %p499 = pneg %p63
        %p500 = scmp.lt.s32.totalorder %s35, 1
        %s501 = scalar_select %p500, %s35, 1
        %s502 = smul.addr %s501, 2
        %s503 = smul.addr %s502, 4
        %s504 = scalar_lea.vmem %s1, %s503
        %p505 = pneg %p92
        %p506 = pneg %p89
        %s507 = smul.u32 2, %s36
        %p508 = scmp.lt.s32.totalorder %s35, 1
        %s509 = scalar_select %p508, %s35, 1
        %p510 = scmp.lt.s32.totalorder %s507, 1
        %s511 = scalar_select %p510, %s507, 1
        %s512 = smul.addr %s509, 2
        %s513 = sadd.s32 %s511, %s512
        %s514 = smul.addr %s513, 8
        %s515 = scalar_lea.vmem %s2, %s514
        %p516 = pneg %p120
        %p517 = pneg %p117
        %s518 = sand.u32 %s133, 1
        %s519 = scalar_lea.sflag [#allocation5], %s518
        %s520 = sand.u32 %s133, 1
        %s521 = scalar_lea.vmem [#allocation4], %s520
        %p522 = pneg %p146
        %p523 = pneg %p143
        %p524 = pneg %p167
        %p525 = pneg %p164
        %p526 = pneg %p188
        %p527 = pneg %p185
        %p528 = pneg %p209
        %p529 = pneg %p206
        %p530 = pneg %p230
        %p531 = pneg %p227
        %p532 = pneg %p251
        %p533 = pneg %p248
        %p534 = pneg %p272
        %p535 = pneg %p269
        %p536 = pneg %p293
        %p537 = pneg %p290
        %p538 = pneg %p314
        %p539 = pneg %p311
        %p540 = pneg %p342
        %p541 = pneg %p339
        %s542 = sand.u32 %s329, 1
        %s543 = scalar_lea.sflag [#allocation6], %s542
        %s544 = sand.u32 %s329, 1
        %s545 = smul.addr %s544, 16
        %s546 = scalar_lea.vmem [#allocation12], %s545
        %s547 = smul.u32 2, %s36
        %p548 = scmp.lt.s32.totalorder %s35, 1
        %s549 = scalar_select %p548, %s35, 1
        %p550 = scmp.lt.s32.totalorder %s547, 1
        %s551 = scalar_select %p550, %s547, 1
        %s552 = smul.addr %s549, 2
        %s553 = sadd.s32 %s551, %s552
        %s554 = smul.addr %s553, 4
        %s555 = scalar_lea.vmem %s0, %s554
        %s556 = smul.u32 2, %s36
        %p557 = scmp.lt.s32.totalorder %s35, 1
        %s558 = scalar_select %p557, %s35, 1
        %s559 = smul.addr %s558, 2
        %s560 = smul.addr %s559, 4
        %s561 = scalar_lea.vmem %s1, %s560
        %s562 = smul.u32 2, %s36
        %p563 = scmp.lt.s32.totalorder %s35, 1
        %s564 = scalar_select %p563, %s35, 1
        %p565 = scmp.lt.s32.totalorder %s562, 1
        %s566 = scalar_select %p565, %s562, 1
        %s567 = smul.addr %s564, 2
        %s568 = sadd.s32 %s566, %s567
        %s569 = smul.addr %s568, 8
        %s570 = scalar_lea.vmem %s2, %s569
        %s571 = smul.u32 2, %s36
        %s572 = smul.u32 2, %s36
        %p574 = scmp.eq.s32.totalorder %s36, 0
        // Predicated region
        $region85: #{tpu_custom_call.1} parent=67 // pred_check
          %p575 = pneg %p574
        $region86: #{tpu_custom_call.1} parent=67 // pred_check_branch
          %577 = sbr.rel (%p575) target = $region88
        $region87: #{tpu_custom_call.1} parent=67 // pred_region
          %v578 = vld [vmem:[%s561] sm:$0xf]
          %v579 = vld [vmem:[%s561 + $0x4] sm:$0xf]
          %v580 = vld [vmem:[%s6] sm:$0xf]
          %v581 = vld [vmem:[%s6 + $0x4] sm:$0xf]
          %v582 = vld [vmem:[#allocation10] sm:$0x1]
          %v584 = vlaneseq
          %v585 = vshrl.u32 %v584, 7
          %v586 = vsub.s32 0, %v585
          %v587 = vrot.slane %v582, %v586
          %v591 = vunpack.c.l.b16 %v578
          %v592 = vunpack.c.l.b16 %v579
          %v593 = vpack.c.b16 %v592, %v591
          %v596 = vunpack.c.l.b16 %v580
          %v597 = vunpack.c.l.b16 %v581
          %v598 = vpack.c.b16 %v597, %v596
          %vm600 = vcmask 130048
          %v602 = vsel %vm600, %v593, 0
          %604 = vmatprep.subr.bf16.mxu0 0
          %605 = vmatpush1.bf16.msra.mxu0 %v598
          %606 = vmatprep.subr.bf16.mxu0 0
          %607 = vmatpush1.bf16.msra.mxu0 0
          %608 = vmatprep.subr.bf16.mxu0 0
          %609 = vmatpush1.bf16.msra.mxu0 0
          %610 = vmatprep.subr.bf16.mxu0 0
          %611 = vmatpush1.bf16.msra.mxu0 0
          %612 = vmatprep.subr.bf16.mxu0 0
          %613 = vmatpush1.bf16.msra.mxu0 0
          %614 = vmatprep.subr.bf16.mxu0 0
          %615 = vmatpush1.bf16.msra.mxu0 0
          %616 = vmatprep.subr.bf16.mxu0 0
          %617 = vmatpush1.bf16.msra.mxu0 0
          %618 = vmatprep.subr.bf16.mxu0 0
          %619 = vmatpush1.bf16.msra.mxu0 0
          %620 = vmatprep.subr.bf16.mxu0 0
          %621 = vmatpush1.bf16.msra.mxu0 0
          %622 = vmatprep.subr.bf16.mxu0 0
          %623 = vmatpush1.bf16.msra.mxu0 0
          %624 = vmatprep.subr.bf16.mxu0 0
          %625 = vmatpush1.bf16.msra.mxu0 0
          %626 = vmatprep.subr.bf16.mxu0 0
          %627 = vmatpush1.bf16.msra.mxu0 0
          %628 = vmatprep.subr.bf16.mxu0 0
          %629 = vmatpush1.bf16.msra.mxu0 0
          %630 = vmatprep.subr.bf16.mxu0 0
          %631 = vmatpush1.bf16.msra.mxu0 0
          %632 = vmatprep.subr.bf16.mxu0 0
          %633 = vmatpush1.bf16.msra.mxu0 0
          %634 = vmatprep.subr.bf16.mxu0 0
          %635 = vmatpush1.bf16.msra.mxu0 0
          %636 = vmatprep.mubr.bf16.mxu0 0
          %637 = vmatmul.mubr.bf16.gmra.mrb[0].mxu0 %v602
          %v638 = vpop.f32.mrb[0].mxu0
          %v639 = vadd.f32 %v587, %v638
          %v640 = vpop.f32.mrb[0].mxu0
          %v641 = vpop.f32.mrb[0].mxu0
          %v642 = vadd.f32 %v587, %v641
          %v643 = vpop.f32.mrb[0].mxu0
          %644 = vdwg.mxu0
          %v645 = vpack.c.bf16 %v642, %v639
          %vm646 = vcmask 261120
          %647 = vst.msk [vmem:[#allocation2] sm:$0xff] %vm646, %v645
          %v648 = vld [vmem:[%s8] sm:$0xf]
          %v649 = vld [vmem:[%s8 + $0x4] sm:$0xf]
          %v650 = vld [vmem:[%s9] sm:$0x1]
          %v652 = vlaneseq
          %v653 = vshrl.u32 %v652, 7
          %v654 = vsub.s32 0, %v653
          %v655 = vrot.slane %v650, %v654
          %v659 = vunpack.c.l.b16 %v648
          %v660 = vunpack.c.l.b16 %v649
          %v661 = vpack.c.b16 %v660, %v659
          %663 = vmatprep.subr.bf16.mxu0 0
          %664 = vmatpush1.bf16.msra.mxu0 %v661
          %665 = vmatprep.subr.bf16.mxu0 0
          %666 = vmatpush1.bf16.msra.mxu0 0
          %667 = vmatprep.subr.bf16.mxu0 0
          %668 = vmatpush1.bf16.msra.mxu0 0
          %669 = vmatprep.subr.bf16.mxu0 0
          %670 = vmatpush1.bf16.msra.mxu0 0
          %671 = vmatprep.subr.bf16.mxu0 0
          %672 = vmatpush1.bf16.msra.mxu0 0
          %673 = vmatprep.subr.bf16.mxu0 0
          %674 = vmatpush1.bf16.msra.mxu0 0
          %675 = vmatprep.subr.bf16.mxu0 0
          %676 = vmatpush1.bf16.msra.mxu0 0
          %677 = vmatprep.subr.bf16.mxu0 0
          %678 = vmatpush1.bf16.msra.mxu0 0
          %679 = vmatprep.subr.bf16.mxu0 0
          %680 = vmatpush1.bf16.msra.mxu0 0
          %681 = vmatprep.subr.bf16.mxu0 0
          %682 = vmatpush1.bf16.msra.mxu0 0
          %683 = vmatprep.subr.bf16.mxu0 0
          %684 = vmatpush1.bf16.msra.mxu0 0
          %685 = vmatprep.subr.bf16.mxu0 0
          %686 = vmatpush1.bf16.msra.mxu0 0
          %687 = vmatprep.subr.bf16.mxu0 0
          %688 = vmatpush1.bf16.msra.mxu0 0
          %689 = vmatprep.subr.bf16.mxu0 0
          %690 = vmatpush1.bf16.msra.mxu0 0
          %691 = vmatprep.subr.bf16.mxu0 0
          %692 = vmatpush1.bf16.msra.mxu0 0
          %693 = vmatprep.subr.bf16.mxu0 0
          %694 = vmatpush1.bf16.msra.mxu0 0
          %695 = vmatprep.mubr.bf16.mxu0 0
          %696 = vmatmul.mubr.bf16.gmra.mrb[0].mxu0 %v602
          %v697 = vpop.f32.mrb[0].mxu0
          %v698 = vadd.f32 %v655, %v697
          %v699 = vpop.f32.mrb[0].mxu0
          %v700 = vpop.f32.mrb[0].mxu0
          %v701 = vadd.f32 %v655, %v700
          %v702 = vpop.f32.mrb[0].mxu0
          %703 = vdwg.mxu0
          %v704 = vpack.c.bf16 %v701, %v698
          %705 = vst.msk [vmem:[#allocation3] sm:$0xff] %vm646, %v704
        $region88: #{tpu_custom_call.1} parent=67 // pred_fallthru
          _
        %v706 = vld [vmem:[%s570] sm:$0xff]
        %v707 = vld [vmem:[%s570 + $0x8] sm:$0xff]
        %v708 = vld [vmem:[%s472] sm:$0x1]
        %710 = vset.pattern.permute.xlu0 0
        %711 = vperm.xlu0 %710, %v706
        %v712 = vpop.permute.xlu0 %711
        %715 = vset.pattern.permute.xlu0 0
        %716 = vperm.xlu0 %715, %v707
        %v717 = vpop.permute.xlu0 %716
        %v720 = vlaneseq
        %v721 = vshrl.u32 %v720, 7
        %v722 = vsub.s32 0, %v721
        %v723 = vrot.slane %v708, %v722
        %v725 = vmul.f32 %v712, %v723
        %v726 = vmul.f32 %v717, %v723
        %v727 = vld [vmem:[%s555] sm:$0xf]
        %v728 = vld [vmem:[%s555 + $0x4] sm:$0xf]
        %v729 = vld [vmem:[#allocation7] sm:$0xf]
        %v730 = vld [vmem:[#allocation7 + $0x4] sm:$0xf]
        %v731 = vld [vmem:[#allocation9] sm:$0x1]
        %v733 = vlaneseq
        %v734 = vshrl.u32 %v733, 7
        %v735 = vsub.s32 0, %v734
        %v736 = vrot.slane %v731, %v735
        %v740 = vunpack.c.l.b16 %v727
        %v741 = vunpack.c.l.b16 %v728
        %v742 = vpack.c.b16 %v741, %v740
        %v745 = vunpack.c.l.b16 %v729
        %v746 = vunpack.c.l.b16 %v730
        %v747 = vpack.c.b16 %v746, %v745
        %vm749 = vcmask 130048
        %v751 = vsel %vm749, %v742, 0
        %753 = vmatprep.subr.bf16.mxu0 0
        %754 = vmatpush1.bf16.msra.mxu0 %v747
        %755 = vmatprep.subr.bf16.mxu0 0
        %756 = vmatpush1.bf16.msra.mxu0 0
        %757 = vmatprep.subr.bf16.mxu0 0
        %758 = vmatpush1.bf16.msra.mxu0 0
        %759 = vmatprep.subr.bf16.mxu0 0
        %760 = vmatpush1.bf16.msra.mxu0 0
        %761 = vmatprep.subr.bf16.mxu0 0
        %762 = vmatpush1.bf16.msra.mxu0 0
        %763 = vmatprep.subr.bf16.mxu0 0
        %764 = vmatpush1.bf16.msra.mxu0 0
        %765 = vmatprep.subr.bf16.mxu0 0
        %766 = vmatpush1.bf16.msra.mxu0 0
        %767 = vmatprep.subr.bf16.mxu0 0
        %768 = vmatpush1.bf16.msra.mxu0 0
        %769 = vmatprep.subr.bf16.mxu0 0
        %770 = vmatpush1.bf16.msra.mxu0 0
        %771 = vmatprep.subr.bf16.mxu0 0
        %772 = vmatpush1.bf16.msra.mxu0 0
        %773 = vmatprep.subr.bf16.mxu0 0
        %774 = vmatpush1.bf16.msra.mxu0 0
        %775 = vmatprep.subr.bf16.mxu0 0
        %776 = vmatpush1.bf16.msra.mxu0 0
        %777 = vmatprep.subr.bf16.mxu0 0
        %778 = vmatpush1.bf16.msra.mxu0 0
        %779 = vmatprep.subr.bf16.mxu0 0
        %780 = vmatpush1.bf16.msra.mxu0 0
        %781 = vmatprep.subr.bf16.mxu0 0
        %782 = vmatpush1.bf16.msra.mxu0 0
        %783 = vmatprep.subr.bf16.mxu0 0
        %784 = vmatpush1.bf16.msra.mxu0 0
        %785 = vmatprep.mubr.bf16.mxu0 0
        %786 = vmatmul.mubr.bf16.gmra.mrb[0].mxu0 %v751
        %v787 = vpop.f32.mrb[0].mxu0
        %v788 = vadd.f32 %v736, %v787
        %v789 = vpop.f32.mrb[0].mxu0
        %v790 = vpop.f32.mrb[0].mxu0
        %v791 = vadd.f32 %v736, %v790
        %v792 = vpop.f32.mrb[0].mxu0
        %793 = vdwg.mxu0
        %v794 = vmul.f32 %v788, %v712
        %v795 = vmul.f32 %v791, %v717
        %v796 = vpack.c.bf16 %v795, %v794
        %v797 = vld [vmem:[#allocation2] sm:$0xff]
        %v798 = vld [vmem:[#allocation3] sm:$0xff]
        %vm799 = vcmask 64512
        %v801 = vsel %vm799, %v796, 0
        %v804 = vsel %vm799, %v797, 0
        %806 = vmatprep.subr.bf16.mxu0 0
        %807 = vmatpush1.bf16.xpose.msra.mxu0 %v804
        %808 = vmatprep.subr.bf16.mxu0 0
        %809 = vmatpush1.bf16.xpose.msra.mxu0 0
        %810 = vmatprep.subr.bf16.mxu0 0
        %811 = vmatpush1.bf16.xpose.msra.mxu0 0
        %812 = vmatprep.subr.bf16.mxu0 0
        %813 = vmatpush1.bf16.xpose.msra.mxu0 0
        %814 = vmatprep.subr.bf16.mxu0 0
        %815 = vmatpush1.bf16.xpose.msra.mxu0 0
        %816 = vmatprep.subr.bf16.mxu0 0
        %817 = vmatpush1.bf16.xpose.msra.mxu0 0
        %818 = vmatprep.subr.bf16.mxu0 0
        %819 = vmatpush1.bf16.xpose.msra.mxu0 0
        %820 = vmatprep.subr.bf16.mxu0 0
        %821 = vmatpush1.bf16.xpose.msra.mxu0 0
        %822 = vmatprep.subr.bf16.mxu0 0
        %823 = vmatpush1.bf16.xpose.msra.mxu0 0
        %824 = vmatprep.subr.bf16.mxu0 0
        %825 = vmatpush1.bf16.xpose.msra.mxu0 0
        %826 = vmatprep.subr.bf16.mxu0 0
        %827 = vmatpush1.bf16.xpose.msra.mxu0 0
        %828 = vmatprep.subr.bf16.mxu0 0
        %829 = vmatpush1.bf16.xpose.msra.mxu0 0
        %830 = vmatprep.subr.bf16.mxu0 0
        %831 = vmatpush1.bf16.xpose.msra.mxu0 0
        %832 = vmatprep.subr.bf16.mxu0 0
        %833 = vmatpush1.bf16.xpose.msra.mxu0 0
        %834 = vmatprep.subr.bf16.mxu0 0
        %835 = vmatpush1.bf16.xpose.msra.mxu0 0
        %836 = vmatprep.subr.bf16.mxu0 0
        %837 = vmatpush1.bf16.xpose.msra.mxu0 0
        %838 = vmatprep.mubr.bf16.mxu0 0
        %839 = vmatmul.mubr.bf16.gmra.mrb[0].mxu0 %v801
        %v840 = vpop.f32.mrb[0].mxu0
        %v841 = vadd.f32 0.0, %v840
        %v842 = vpop.f32.mrb[0].mxu0
        %v843 = vpop.f32.mrb[0].mxu0
        %v844 = vadd.f32 0.0, %v843
        %v845 = vpop.f32.mrb[0].mxu0
        %846 = vdwg.mxu0
        %v847 = vsel %vm749, %v841, -inf
        %848 = vmax.xlane.f32.xlu0 %v847
        %v849 = vpop.xlane.xlu0 %848
        %v850 = vsel %vm749, %v844, -inf
        %851 = vmax.xlane.f32.xlu0 %v850
        %v852 = vpop.xlane.xlu0 %851
        %v853 = vsub.f32 %v841, %v849
        %v854 = vsub.f32 %v844, %v852
        %v855 = vmul.f32 %v853, %v725
        %v856 = vmul.f32 %v854, %v726
        %v857 = vmul.f32 %v855, 1.442695
        %v858 = vpow.pop %v857
        %v859 = vmul.f32 %v856, 1.442695
        %v860 = vpow.pop %v859
        %v861 = vmul.f32 %v858, %v725
        %v862 = vmul.f32 %v860, %v726
        %v863 = vsel %vm749, %v861, 0.0
        %864 = vadd.xlane.f32.xlu0 %v863
        %v865 = vpop.xlane.xlu0 %864
        %v866 = vsel %vm749, %v862, 0.0
        %867 = vadd.xlane.f32.xlu0 %v866
        %v868 = vpop.xlane.xlu0 %867
        %v869 = vadd.f32 %v865, 1e-16
        %v870 = vadd.f32 %v868, 1e-16
        %v871 = vrcp.pop %v869
        %v872 = vrcp.pop %v870
        %v873 = vmul.f32 %v861, %v871
        %v874 = vmul.f32 %v862, %v872
        %v875 = vpack.c.bf16 %v874, %v873
        %v877 = vsel %vm749, %v875, 0
        %879 = vmatprep.subr.bf16.mxu0 0
        %880 = vmatpush1.bf16.msra.mxu0 %v798
        %881 = vmatprep.subr.bf16.mxu0 0
        %882 = vmatpush1.bf16.msra.mxu0 0
        %883 = vmatprep.subr.bf16.mxu0 0
        %884 = vmatpush1.bf16.msra.mxu0 0
        %885 = vmatprep.subr.bf16.mxu0 0
        %886 = vmatpush1.bf16.msra.mxu0 0
        %887 = vmatprep.subr.bf16.mxu0 0
        %888 = vmatpush1.bf16.msra.mxu0 0
        %889 = vmatprep.subr.bf16.mxu0 0
        %890 = vmatpush1.bf16.msra.mxu0 0
        %891 = vmatprep.subr.bf16.mxu0 0
        %892 = vmatpush1.bf16.msra.mxu0 0
        %893 = vmatprep.subr.bf16.mxu0 0
        %894 = vmatpush1.bf16.msra.mxu0 0
        %895 = vmatprep.subr.bf16.mxu0 0
        %896 = vmatpush1.bf16.msra.mxu0 0
        %897 = vmatprep.subr.bf16.mxu0 0
        %898 = vmatpush1.bf16.msra.mxu0 0
        %899 = vmatprep.subr.bf16.mxu0 0
        %900 = vmatpush1.bf16.msra.mxu0 0
        %901 = vmatprep.subr.bf16.mxu0 0
        %902 = vmatpush1.bf16.msra.mxu0 0
        %903 = vmatprep.subr.bf16.mxu0 0
        %904 = vmatpush1.bf16.msra.mxu0 0
        %905 = vmatprep.subr.bf16.mxu0 0
        %906 = vmatpush1.bf16.msra.mxu0 0
        %907 = vmatprep.subr.bf16.mxu0 0
        %908 = vmatpush1.bf16.msra.mxu0 0
        %909 = vmatprep.subr.bf16.mxu0 0
        %910 = vmatpush1.bf16.msra.mxu0 0
        %911 = vmatprep.mubr.bf16.mxu0 0
        %912 = vmatmul.mubr.bf16.gmra.mrb[0].mxu0 %v877
        %v913 = vpop.f32.mrb[0].mxu0
        %v914 = vadd.f32 0.0, %v913
        %v915 = vpop.f32.mrb[0].mxu0
        %v916 = vpop.f32.mrb[0].mxu0
        %v917 = vadd.f32 0.0, %v916
        %v918 = vpop.f32.mrb[0].mxu0
        %919 = vdwg.mxu0
        %921 = vrot.lane.b32.xlu0 %v796, 120
        %v922 = vpop.permute.xlu0 %921
        %924 = vrot.lane.b32.xlu0 %v797, 120
        %v925 = vpop.permute.xlu0 %924
        %v927 = vsel %vm799, %v922, 0
        %v930 = vsel %vm799, %v925, 0
        %932 = vmatprep.subr.bf16.mxu0 0
        %933 = vmatpush1.bf16.xpose.msra.mxu0 %v930
        %934 = vmatprep.subr.bf16.mxu0 0
        %935 = vmatpush1.bf16.xpose.msra.mxu0 0
        %936 = vmatprep.subr.bf16.mxu0 0
        %937 = vmatpush1.bf16.xpose.msra.mxu0 0
        %938 = vmatprep.subr.bf16.mxu0 0
        %939 = vmatpush1.bf16.xpose.msra.mxu0 0
        %940 = vmatprep.subr.bf16.mxu0 0
        %941 = vmatpush1.bf16.xpose.msra.mxu0 0
        %942 = vmatprep.subr.bf16.mxu0 0
        %943 = vmatpush1.bf16.xpose.msra.mxu0 0
        %944 = vmatprep.subr.bf16.mxu0 0
        %945 = vmatpush1.bf16.xpose.msra.mxu0 0
        %946 = vmatprep.subr.bf16.mxu0 0
        %947 = vmatpush1.bf16.xpose.msra.mxu0 0
        %948 = vmatprep.subr.bf16.mxu0 0
        %949 = vmatpush1.bf16.xpose.msra.mxu0 0
        %950 = vmatprep.subr.bf16.mxu0 0
        %951 = vmatpush1.bf16.xpose.msra.mxu0 0
        %952 = vmatprep.subr.bf16.mxu0 0
        %953 = vmatpush1.bf16.xpose.msra.mxu0 0
        %954 = vmatprep.subr.bf16.mxu0 0
        %955 = vmatpush1.bf16.xpose.msra.mxu0 0
        %956 = vmatprep.subr.bf16.mxu0 0
        %957 = vmatpush1.bf16.xpose.msra.mxu0 0
        %958 = vmatprep.subr.bf16.mxu0 0
        %959 = vmatpush1.bf16.xpose.msra.mxu0 0
        %960 = vmatprep.subr.bf16.mxu0 0
        %961 = vmatpush1.bf16.xpose.msra.mxu0 0
        %962 = vmatprep.subr.bf16.mxu0 0
        %963 = vmatpush1.bf16.xpose.msra.mxu0 0
        %964 = vmatprep.mubr.bf16.mxu0 0
        %965 = vmatmul.mubr.bf16.gmra.mrb[0].mxu0 %v927
        %v966 = vpop.f32.mrb[0].mxu0
        %v967 = vadd.f32 0.0, %v966
        %v968 = vpop.f32.mrb[0].mxu0
        %v969 = vpop.f32.mrb[0].mxu0
        %v970 = vadd.f32 0.0, %v969
        %v971 = vpop.f32.mrb[0].mxu0
        %972 = vdwg.mxu0
        %v973 = vsel %vm749, %v967, -inf
        %974 = vmax.xlane.f32.xlu0 %v973
        %v975 = vpop.xlane.xlu0 %974
        %v976 = vsel %vm749, %v970, -inf
        %977 = vmax.xlane.f32.xlu0 %v976
        %v978 = vpop.xlane.xlu0 %977
        %v979 = vsub.f32 %v967, %v975
        %v980 = vsub.f32 %v970, %v978
        %v981 = vmul.f32 %v979, %v725
        %v982 = vmul.f32 %v980, %v726
        %v983 = vmul.f32 %v981, 1.442695
        %v984 = vpow.pop %v983
        %v985 = vmul.f32 %v982, 1.442695
        %v986 = vpow.pop %v985
        %v987 = vmul.f32 %v984, %v725
        %v988 = vmul.f32 %v986, %v726
        %v989 = vsel %vm749, %v987, 0.0
        %990 = vadd.xlane.f32.xlu0 %v989
        %v991 = vpop.xlane.xlu0 %990
        %v992 = vsel %vm749, %v988, 0.0
        %993 = vadd.xlane.f32.xlu0 %v992
        %v994 = vpop.xlane.xlu0 %993
        %v995 = vadd.f32 %v991, 1e-16
        %v996 = vadd.f32 %v994, 1e-16
        %v997 = vrcp.pop %v995
        %v998 = vrcp.pop %v996
        %v999 = vmul.f32 %v987, %v997
        %v1000 = vmul.f32 %v988, %v998
        %v1001 = vpack.c.bf16 %v1000, %v999
        %1003 = vrot.lane.b32.xlu0 %v798, 120
        %v1004 = vpop.permute.xlu0 %1003
        %v1007 = vsel %vm749, %v1001, 0
        %1009 = vmatprep.subr.bf16.mxu0 0
        %1010 = vmatpush1.bf16.msra.mxu0 %v1004
        %1011 = vmatprep.subr.bf16.mxu0 0
        %1012 = vmatpush1.bf16.msra.mxu0 0
        %1013 = vmatprep.subr.bf16.mxu0 0
        %1014 = vmatpush1.bf16.msra.mxu0 0
        %1015 = vmatprep.subr.bf16.mxu0 0
        %1016 = vmatpush1.bf16.msra.mxu0 0
        %1017 = vmatprep.subr.bf16.mxu0 0
        %1018 = vmatpush1.bf16.msra.mxu0 0
        %1019 = vmatprep.subr.bf16.mxu0 0
        %1020 = vmatpush1.bf16.msra.mxu0 0
        %1021 = vmatprep.subr.bf16.mxu0 0
        %1022 = vmatpush1.bf16.msra.mxu0 0
        %1023 = vmatprep.subr.bf16.mxu0 0
        %1024 = vmatpush1.bf16.msra.mxu0 0
        %1025 = vmatprep.subr.bf16.mxu0 0
        %1026 = vmatpush1.bf16.msra.mxu0 0
        %1027 = vmatprep.subr.bf16.mxu0 0
        %1028 = vmatpush1.bf16.msra.mxu0 0
        %1029 = vmatprep.subr.bf16.mxu0 0
        %1030 = vmatpush1.bf16.msra.mxu0 0
        %1031 = vmatprep.subr.bf16.mxu0 0
        %1032 = vmatpush1.bf16.msra.mxu0 0
        %1033 = vmatprep.subr.bf16.mxu0 0
        %1034 = vmatpush1.bf16.msra.mxu0 0
        %1035 = vmatprep.subr.bf16.mxu0 0
        %1036 = vmatpush1.bf16.msra.mxu0 0
        %1037 = vmatprep.subr.bf16.mxu0 0
        %1038 = vmatpush1.bf16.msra.mxu0 0
        %1039 = vmatprep.subr.bf16.mxu0 0
        %1040 = vmatpush1.bf16.msra.mxu0 0
        %1041 = vmatprep.mubr.bf16.mxu0 0
        %1042 = vmatmul.mubr.bf16.gmra.mrb[0].mxu0 %v1007
        %v1043 = vpop.f32.mrb[0].mxu0
        %v1044 = vadd.f32 0.0, %v1043
        %v1045 = vpop.f32.mrb[0].mxu0
        %v1046 = vpop.f32.mrb[0].mxu0
        %v1047 = vadd.f32 0.0, %v1046
        %v1048 = vpop.f32.mrb[0].mxu0
        %1049 = vdwg.mxu0
        %1050 = vrot.lane.b32.xlu0 %v796, 112
        %v1051 = vpop.permute.xlu0 %1050
        %1052 = vrot.lane.b32.xlu0 %v797, 112
        %v1053 = vpop.permute.xlu0 %1052
        %v1055 = vsel %vm799, %v1051, 0
        %v1058 = vsel %vm799, %v1053, 0
        %1060 = vmatprep.subr.bf16.mxu0 0
        %1061 = vmatpush1.bf16.xpose.msra.mxu0 %v1058
        %1062 = vmatprep.subr.bf16.mxu0 0
        %1063 = vmatpush1.bf16.xpose.msra.mxu0 0
        %1064 = vmatprep.subr.bf16.mxu0 0
        %1065 = vmatpush1.bf16.xpose.msra.mxu0 0
        %1066 = vmatprep.subr.bf16.mxu0 0
        %1067 = vmatpush1.bf16.xpose.msra.mxu0 0
        %1068 = vmatprep.subr.bf16.mxu0 0
        %1069 = vmatpush1.bf16.xpose.msra.mxu0 0
        %1070 = vmatprep.subr.bf16.mxu0 0
        %1071 = vmatpush1.bf16.xpose.msra.mxu0 0
        %1072 = vmatprep.subr.bf16.mxu0 0
        %1073 = vmatpush1.bf16.xpose.msra.mxu0 0
        %1074 = vmatprep.subr.bf16.mxu0 0
        %1075 = vmatpush1.bf16.xpose.msra.mxu0 0
        %1076 = vmatprep.subr.bf16.mxu0 0
        %1077 = vmatpush1.bf16.xpose.msra.mxu0 0
        %1078 = vmatprep.subr.bf16.mxu0 0
        %1079 = vmatpush1.bf16.xpose.msra.mxu0 0
        %1080 = vmatprep.subr.bf16.mxu0 0
        %1081 = vmatpush1.bf16.xpose.msra.mxu0 0
        %1082 = vmatprep.subr.bf16.mxu0 0
        %1083 = vmatpush1.bf16.xpose.msra.mxu0 0
        %1084 = vmatprep.subr.bf16.mxu0 0
        %1085 = vmatpush1.bf16.xpose.msra.mxu0 0
        %1086 = vmatprep.subr.bf16.mxu0 0
        %1087 = vmatpush1.bf16.xpose.msra.mxu0 0
        %1088 = vmatprep.subr.bf16.mxu0 0
        %1089 = vmatpush1.bf16.xpose.msra.mxu0 0
        %1090 = vmatprep.subr.bf16.mxu0 0
        %1091 = vmatpush1.bf16.xpose.msra.mxu0 0
        %1092 = vmatprep.mubr.bf16.mxu0 0
        %1093 = vmatmul.mubr.bf16.gmra.mrb[0].mxu0 %v1055
        %v1094 = vpop.f32.mrb[0].mxu0
        %v1095 = vadd.f32 0.0, %v1094
        %v1096 = vpop.f32.mrb[0].mxu0
        %v1097 = vpop.f32.mrb[0].mxu0
        %v1098 = vadd.f32 0.0, %v1097
        %v1099 = vpop.f32.mrb[0].mxu0
        %1100 = vdwg.mxu0
        %v1101 = vsel %vm749, %v1095, -inf
        %1102 = vmax.xlane.f32.xlu0 %v1101
        %v1103 = vpop.xlane.xlu0 %1102
        %v1104 = vsel %vm749, %v1098, -inf
        %1105 = vmax.xlane.f32.xlu0 %v1104
        %v1106 = vpop.xlane.xlu0 %1105
        %v1107 = vsub.f32 %v1095, %v1103
        %v1108 = vsub.f32 %v1098, %v1106
        %v1109 = vmul.f32 %v1107, %v725
        %v1110 = vmul.f32 %v1108, %v726
        %v1111 = vmul.f32 %v1109, 1.442695
        %v1112 = vpow.pop %v1111
        %v1113 = vmul.f32 %v1110, 1.442695
        %v1114 = vpow.pop %v1113
        %v1115 = vmul.f32 %v1112, %v725
        %v1116 = vmul.f32 %v1114, %v726
        %v1117 = vsel %vm749, %v1115, 0.0
        %1118 = vadd.xlane.f32.xlu0 %v1117
        %v1119 = vpop.xlane.xlu0 %1118
        %v1120 = vsel %vm749, %v1116, 0.0
        %1121 = vadd.xlane.f32.xlu0 %v1120
        %v1122 = vpop.xlane.xlu0 %1121
        %v1123 = vadd.f32 %v1119, 1e-16
        %v1124 = vadd.f32 %v1122, 1e-16
        %v1125 = vrcp.pop %v1123
        %v1126 = vrcp.pop %v1124
        %v1127 = vmul.f32 %v1115, %v1125
        %v1128 = vmul.f32 %v1116, %v1126
        %v1129 = vpack.c.bf16 %v1128, %v1127
        %1130 = vrot.lane.b32.xlu0 %v798, 112
        %v1131 = vpop.permute.xlu0 %1130
        %v1134 = vsel %vm749, %v1129, 0
        %1136 = vmatprep.subr.bf16.mxu0 0
        %1137 = vmatpush1.bf16.msra.mxu0 %v1131
        %1138 = vmatprep.subr.bf16.mxu0 0
        %1139 = vmatpush1.bf16.msra.mxu0 0
        %1140 = vmatprep.subr.bf16.mxu0 0
        %1141 = vmatpush1.bf16.msra.mxu0 0
        %1142 = vmatprep.subr.bf16.mxu0 0
        %1143 = vmatpush1.bf16.msra.mxu0 0
        %1144 = vmatprep.subr.bf16.mxu0 0
        %1145 = vmatpush1.bf16.msra.mxu0 0
        %1146 = vmatprep.subr.bf16.mxu0 0
        %1147 = vmatpush1.bf16.msra.mxu0 0
        %1148 = vmatprep.subr.bf16.mxu0 0
        %1149 = vmatpush1.bf16.msra.mxu0 0
        %1150 = vmatprep.subr.bf16.mxu0 0
        %1151 = vmatpush1.bf16.msra.mxu0 0
        %1152 = vmatprep.subr.bf16.mxu0 0
        %1153 = vmatpush1.bf16.msra.mxu0 0
        %1154 = vmatprep.subr.bf16.mxu0 0
        %1155 = vmatpush1.bf16.msra.mxu0 0
        %1156 = vmatprep.subr.bf16.mxu0 0
        %1157 = vmatpush1.bf16.msra.mxu0 0
        %1158 = vmatprep.subr.bf16.mxu0 0
        %1159 = vmatpush1.bf16.msra.mxu0 0
        %1160 = vmatprep.subr.bf16.mxu0 0
        %1161 = vmatpush1.bf16.msra.mxu0 0
        %1162 = vmatprep.subr.bf16.mxu0 0
        %1163 = vmatpush1.bf16.msra.mxu0 0
        %1164 = vmatprep.subr.bf16.mxu0 0
        %1165 = vmatpush1.bf16.msra.mxu0 0
        %1166 = vmatprep.subr.bf16.mxu0 0
        %1167 = vmatpush1.bf16.msra.mxu0 0
        %1168 = vmatprep.mubr.bf16.mxu0 0
        %1169 = vmatmul.mubr.bf16.gmra.mrb[0].mxu0 %v1134
        %v1170 = vpop.f32.mrb[0].mxu0
        %v1171 = vadd.f32 0.0, %v1170
        %v1172 = vpop.f32.mrb[0].mxu0
        %v1173 = vpop.f32.mrb[0].mxu0
        %v1174 = vadd.f32 0.0, %v1173
        %v1175 = vpop.f32.mrb[0].mxu0
        %1176 = vdwg.mxu0
        %1177 = vrot.lane.b32.xlu0 %v796, 104
        %v1178 = vpop.permute.xlu0 %1177
        %1179 = vrot.lane.b32.xlu0 %v797, 104
        %v1180 = vpop.permute.xlu0 %1179
        %v1182 = vsel %vm799, %v1178, 0
        %v1185 = vsel %vm799, %v1180, 0
        %1187 = vmatprep.subr.bf16.mxu0 0
        %1188 = vmatpush1.bf16.xpose.msra.mxu0 %v1185
        %1189 = vmatprep.subr.bf16.mxu0 0
        %1190 = vmatpush1.bf16.xpose.msra.mxu0 0
        %1191 = vmatprep.subr.bf16.mxu0 0
        %1192 = vmatpush1.bf16.xpose.msra.mxu0 0
        %1193 = vmatprep.subr.bf16.mxu0 0
        %1194 = vmatpush1.bf16.xpose.msra.mxu0 0
        %1195 = vmatprep.subr.bf16.mxu0 0
        %1196 = vmatpush1.bf16.xpose.msra.mxu0 0
        %1197 = vmatprep.subr.bf16.mxu0 0
        %1198 = vmatpush1.bf16.xpose.msra.mxu0 0
        %1199 = vmatprep.subr.bf16.mxu0 0
        %1200 = vmatpush1.bf16.xpose.msra.mxu0 0
        %1201 = vmatprep.subr.bf16.mxu0 0
        %1202 = vmatpush1.bf16.xpose.msra.mxu0 0
        %1203 = vmatprep.subr.bf16.mxu0 0
        %1204 = vmatpush1.bf16.xpose.msra.mxu0 0
        %1205 = vmatprep.subr.bf16.mxu0 0
        %1206 = vmatpush1.bf16.xpose.msra.mxu0 0
        %1207 = vmatprep.subr.bf16.mxu0 0
        %1208 = vmatpush1.bf16.xpose.msra.mxu0 0
        %1209 = vmatprep.subr.bf16.mxu0 0
        %1210 = vmatpush1.bf16.xpose.msra.mxu0 0
        %1211 = vmatprep.subr.bf16.mxu0 0
        %1212 = vmatpush1.bf16.xpose.msra.mxu0 0
        %1213 = vmatprep.subr.bf16.mxu0 0
        %1214 = vmatpush1.bf16.xpose.msra.mxu0 0
        %1215 = vmatprep.subr.bf16.mxu0 0
        %1216 = vmatpush1.bf16.xpose.msra.mxu0 0
        %1217 = vmatprep.subr.bf16.mxu0 0
        %1218 = vmatpush1.bf16.xpose.msra.mxu0 0
        %1219 = vmatprep.mubr.bf16.mxu0 0
        %1220 = vmatmul.mubr.bf16.gmra.mrb[0].mxu0 %v1182
        %v1221 = vpop.f32.mrb[0].mxu0
        %v1222 = vadd.f32 0.0, %v1221
        %v1223 = vpop.f32.mrb[0].mxu0
        %v1224 = vpop.f32.mrb[0].mxu0
        %v1225 = vadd.f32 0.0, %v1224
        %v1226 = vpop.f32.mrb[0].mxu0
        %1227 = vdwg.mxu0
        %v1228 = vsel %vm749, %v1222, -inf
        %1229 = vmax.xlane.f32.xlu0 %v1228
        %v1230 = vpop.xlane.xlu0 %1229
        %v1231 = vsel %vm749, %v1225, -inf
        %1232 = vmax.xlane.f32.xlu0 %v1231
        %v1233 = vpop.xlane.xlu0 %1232
        %v1234 = vsub.f32 %v1222, %v1230
        %v1235 = vsub.f32 %v1225, %v1233
        %v1236 = vmul.f32 %v1234, %v725
        %v1237 = vmul.f32 %v1235, %v726
        %v1238 = vmul.f32 %v1236, 1.442695
        %v1239 = vpow.pop %v1238
        %v1240 = vmul.f32 %v1237, 1.442695
        %v1241 = vpow.pop %v1240
        %v1242 = vmul.f32 %v1239, %v725
        %v1243 = vmul.f32 %v1241, %v726
        %v1244 = vsel %vm749, %v1242, 0.0
        %1245 = vadd.xlane.f32.xlu0 %v1244
        %v1246 = vpop.xlane.xlu0 %1245
        %v1247 = vsel %vm749, %v1243, 0.0
        %1248 = vadd.xlane.f32.xlu0 %v1247
        %v1249 = vpop.xlane.xlu0 %1248
        %v1250 = vadd.f32 %v1246, 1e-16
        %v1251 = vadd.f32 %v1249, 1e-16
        %v1252 = vrcp.pop %v1250
        %v1253 = vrcp.pop %v1251
        %v1254 = vmul.f32 %v1242, %v1252
        %v1255 = vmul.f32 %v1243, %v1253
        %v1256 = vpack.c.bf16 %v1255, %v1254
        %1257 = vrot.lane.b32.xlu0 %v798, 104
        %v1258 = vpop.permute.xlu0 %1257
        %v1261 = vsel %vm749, %v1256, 0
        %1263 = vmatprep.subr.bf16.mxu0 0
        %1264 = vmatpush1.bf16.msra.mxu0 %v1258
        %1265 = vmatprep.subr.bf16.mxu0 0
        %1266 = vmatpush1.bf16.msra.mxu0 0
        %1267 = vmatprep.subr.bf16.mxu0 0
        %1268 = vmatpush1.bf16.msra.mxu0 0
        %1269 = vmatprep.subr.bf16.mxu0 0
        %1270 = vmatpush1.bf16.msra.mxu0 0
        %1271 = vmatprep.subr.bf16.mxu0 0
        %1272 = vmatpush1.bf16.msra.mxu0 0
        %1273 = vmatprep.subr.bf16.mxu0 0
        %1274 = vmatpush1.bf16.msra.mxu0 0
        %1275 = vmatprep.subr.bf16.mxu0 0
        %1276 = vmatpush1.bf16.msra.mxu0 0
        %1277 = vmatprep.subr.bf16.mxu0 0
        %1278 = vmatpush1.bf16.msra.mxu0 0
        %1279 = vmatprep.subr.bf16.mxu0 0
        %1280 = vmatpush1.bf16.msra.mxu0 0
        %1281 = vmatprep.subr.bf16.mxu0 0
        %1282 = vmatpush1.bf16.msra.mxu0 0
        %1283 = vmatprep.subr.bf16.mxu0 0
        %1284 = vmatpush1.bf16.msra.mxu0 0
        %1285 = vmatprep.subr.bf16.mxu0 0
        %1286 = vmatpush1.bf16.msra.mxu0 0
        %1287 = vmatprep.subr.bf16.mxu0 0
        %1288 = vmatpush1.bf16.msra.mxu0 0
        %1289 = vmatprep.subr.bf16.mxu0 0
        %1290 = vmatpush1.bf16.msra.mxu0 0
        %1291 = vmatprep.subr.bf16.mxu0 0
        %1292 = vmatpush1.bf16.msra.mxu0 0
        %1293 = vmatprep.subr.bf16.mxu0 0
        %1294 = vmatpush1.bf16.msra.mxu0 0
        %1295 = vmatprep.mubr.bf16.mxu0 0
        %1296 = vmatmul.mubr.bf16.gmra.mrb[0].mxu0 %v1261
        %v1297 = vpop.f32.mrb[0].mxu0
        %v1298 = vadd.f32 0.0, %v1297
        %v1299 = vpop.f32.mrb[0].mxu0
        %v1300 = vpop.f32.mrb[0].mxu0
        %v1301 = vadd.f32 0.0, %v1300
        %v1302 = vpop.f32.mrb[0].mxu0
        %1303 = vdwg.mxu0
        %1306 = vrot.lane.b32.xlu0 %v1044, 8
        %v1307 = vpop.permute.xlu0 %1306
        %1308 = vrot.lane.b32.xlu0 %v1047, 8
        %v1309 = vpop.permute.xlu0 %1308
        %1314 = vrot.lane.b32.xlu0 %v1171, 16
        %v1315 = vpop.permute.xlu0 %1314
        %1316 = vrot.lane.b32.xlu0 %v1174, 16
        %v1317 = vpop.permute.xlu0 %1316
        %1322 = vrot.lane.b32.xlu0 %v1298, 24
        %v1323 = vpop.permute.xlu0 %1322
        %1324 = vrot.lane.b32.xlu0 %v1301, 24
        %v1325 = vpop.permute.xlu0 %1324
        %v1328 = vsel %vm799, %v914, %v1307
        %v1329 = vsel %vm799, %v917, %v1309
        %v1330 = vsel %vm749, %v1328, %v1315
        %v1331 = vsel %vm749, %v1329, %v1317
        %vm1332 = vcmask 195584
        %v1333 = vsel %vm1332, %v1330, %v1323
        %v1334 = vsel %vm1332, %v1331, %v1325
        %v1335 = vadd.f32 %v794, %v1333
        %v1336 = vadd.f32 %v795, %v1334
        %v1337 = vpack.c.bf16 %v1336, %v1335
        %v1338 = vld [vmem:[%s10] sm:$0xf]
        %v1339 = vld [vmem:[%s10 + $0x4] sm:$0xf]
        %v1340 = vld [vmem:[%s10 + $0x8] sm:$0xf]
        %v1341 = vld [vmem:[%s10 + $0xc] sm:$0xf]
        %v1342 = vld [vmem:[%s11] sm:$0x1]
        %v1344 = vlaneseq
        %v1345 = vshrl.u32 %v1344, 7
        %v1346 = vsub.s32 0, %v1345
        %v1347 = vrot.slane %v1342, %v1346
        %v1353 = vunpack.c.l.b16 %v1338
        %v1354 = vunpack.c.l.b16 %v1339
        %v1355 = vunpack.c.l.b16 %v1340
        %v1356 = vunpack.c.l.b16 %v1341
        %v1357 = vpack.c.b16 %v1354, %v1353
        %v1358 = vpack.c.b16 %v1356, %v1355
        %vm1361 = vcmask 261120
        %v1363 = vsel %vm1361, %v1337, 0
        %1365 = vmatprep.subr.bf16.mxu0 0
        %1366 = vmatpush1.bf16.msra.mxu0 %v1357
        %1367 = vmatprep.subr.bf16.mxu0 0
        %1368 = vmatpush1.bf16.msra.mxu0 %v1358
        %1369 = vmatprep.subr.bf16.mxu0 0
        %1370 = vmatpush1.bf16.msra.mxu0 0
        %1371 = vmatprep.subr.bf16.mxu0 0
        %1372 = vmatpush1.bf16.msra.mxu0 0
        %1373 = vmatprep.subr.bf16.mxu0 0
        %1374 = vmatpush1.bf16.msra.mxu0 0
        %1375 = vmatprep.subr.bf16.mxu0 0
        %1376 = vmatpush1.bf16.msra.mxu0 0
        %1377 = vmatprep.subr.bf16.mxu0 0
        %1378 = vmatpush1.bf16.msra.mxu0 0
        %1379 = vmatprep.subr.bf16.mxu0 0
        %1380 = vmatpush1.bf16.msra.mxu0 0
        %1381 = vmatprep.subr.bf16.mxu0 0
        %1382 = vmatpush1.bf16.msra.mxu0 0
        %1383 = vmatprep.subr.bf16.mxu0 0
        %1384 = vmatpush1.bf16.msra.mxu0 0
        %1385 = vmatprep.subr.bf16.mxu0 0
        %1386 = vmatpush1.bf16.msra.mxu0 0
        %1387 = vmatprep.subr.bf16.mxu0 0
        %1388 = vmatpush1.bf16.msra.mxu0 0
        %1389 = vmatprep.subr.bf16.mxu0 0
        %1390 = vmatpush1.bf16.msra.mxu0 0
        %1391 = vmatprep.subr.bf16.mxu0 0
        %1392 = vmatpush1.bf16.msra.mxu0 0
        %1393 = vmatprep.subr.bf16.mxu0 0
        %1394 = vmatpush1.bf16.msra.mxu0 0
        %1395 = vmatprep.subr.bf16.mxu0 0
        %1396 = vmatpush1.bf16.msra.mxu0 0
        %1397 = vmatprep.mubr.bf16.mxu0 0
        %1398 = vmatmul.mubr.bf16.gmra.mrb[0].mxu0 %v1363
        %v1399 = vpop.f32.mrb[0].mxu0
        %v1400 = vadd.f32 %v1347, %v1399
        %v1401 = vpop.f32.mrb[0].mxu0
        %v1402 = vpop.f32.mrb[0].mxu0
        %v1403 = vadd.f32 %v1347, %v1402
        %v1404 = vpop.f32.mrb[0].mxu0
        %1405 = vdwg.mxu0
        %v1406 = vmul.f32 %v1400, %v712
        %v1407 = vmul.f32 %v1403, %v717
        %v1408 = vmax.f32 %v1406, 0.0
        %v1409 = vmax.f32 %v1407, 0.0
        %v1410 = vadd.f32 %v1335, %v1408
        %v1411 = vadd.f32 %v1336, %v1409
        %1412 = vst.msk [vmem:[%s546] sm:$0xff] %vm1361, %v1410
        %1413 = vst.msk [vmem:[%s546 + $0x8] sm:$0xff] %vm1361, %v1411
        %s1414 = sand.u32 %s329, 1
        %s1415 = scalar_lea.sflag [#allocation6], %s1414
        %s1416 = sand.u32 %s329, 1
        %s1417 = smul.addr %s1416, 16
        %s1418 = scalar_lea.vmem [#allocation12], %s1417
        // Predicated region
        $region89: #{tpu_custom_call.1} parent=67 // pred_check
          %p1419 = pneg %p339
        $region90: #{tpu_custom_call.1} parent=67 // pred_check_branch
          %1421 = sbr.rel (%p1419) target = $region92
        $region91: #{tpu_custom_call.1} parent=67 // pred_region
          %s1422 = smul.u32 2, %s36
          %s1424 = ssub.s32 256, 256
          %1425 = vsyncadd %s1415, %s1424
          %s1426 = smul.addr %s35, 2
          %s1427 = sadd.s32 %s1422, %s1426
          %s1428 = smul.addr %s1427, 128
          %s1429 = scalar_lea.hbm %s12, %s1428
          %s1430 = sshll.u32 %s1418, 4
          %s1431 = int_to_ptr.vmem [resolvable:$true] %s1430
          %1436 = dma.vmem_to_hbm [thread:$0]  %s1431, 256, %s1429, %s1415, 128, 128, 8
        $region92: #{tpu_custom_call.1} parent=67 // pred_fallthru
          _
      $region68: #{tpu_custom_call.1} parent=5 // pred_fallthru
        _
      %p1437 = scmp.le.s32.totalorder 2, %s26
      // Predicated region
      $region93: #{tpu_custom_call.1} parent=5 // pred_check
        %p1438 = pneg %p1437
      $region94: #{tpu_custom_call.1} parent=5 // pred_check_branch
        %1440 = sbr.rel (%p1438) target = $region96
      $region95: #{tpu_custom_call.1} parent=5 // pred_region
        %s1441 = ssub.s32 %s26, 2
        // Predicated region
        $region97: #{tpu_custom_call.1} parent=95 // pred_check
          %p1442 = pneg %p345
        $region98: #{tpu_custom_call.1} parent=95 // pred_check_branch
          %1444 = sbr.rel (%p1442) target = $region100
        $region99: #{tpu_custom_call.1} parent=95 // pred_region
          %s1445 = sand.u32 %s330, 1
          %s1446 = scalar_lea.sflag [#allocation6], %s1445
          %s1447 = sand.u32 %s330, 1
          %s1448 = smul.addr %s1447, 16
          %s1449 = scalar_lea.vmem [#allocation12], %s1448
          %1450 = dma.done %s1446, 256
        $region100: #{tpu_custom_call.1} parent=95 // pred_fallthru
          _
      $region96: #{tpu_custom_call.1} parent=5 // pred_fallthru
        _
    $region6: #{tpu_custom_call.1} parent=1 // loop_footer
      %s30 = sadd.s32 1, %s26
    $region7: #{tpu_custom_call.1} parent=1 // loop_footer_branch
      %25 = sbr.rel target = $region3
    $region8: #{tpu_custom_call.1} parent=1 // loop_exit
      _
    %1451 = vsyncpa [#allocation5], 1
    %s1452 = scalar_lea.sflag [#allocation5], 1
    %1453 = vsyncpa %s1452, 1
    %1454 = vsyncpa [#allocation8], 1
    %1455 = vsyncpa [#allocation11], 1
    %1456 = vsyncpa [#allocation6], 1
    %s1457 = scalar_lea.sflag [#allocation6], 1
    %1458 = vsyncpa %s1457, 1

</llo_original>
